<compile_context>
chip_gen: v6e
topology: v6e:2x2x1
jax: 0.10.0
libtpu: 0.0.40
codegen_flags: <defaults>
</compile_context>

<pallas_src>
import functools
import math

import jax
import jax.numpy as jnp
import numpy as np
from jax.experimental import pallas as pl
from jax.experimental.pallas import tpu as pltpu


# ----------------------------- Pallas kernel ------------------------------ #
def encoder_kernel(
    x_ref,                       # (rows, D)          rows = nb_batch * S
    wqkv_ref, bqkv_ref,          # (1, D, 3*h*d_k) [cd], (1, 1, 3*h*d_k) f32
    wo_ref, bo_ref,              # (1, h*d_k, D)   [cd], (1, 1, D)       f32
    g0_ref, be0_ref,             # (1, 1, D) f32
    w1_ref, b1_ref,              # (1, D, d_ff)    [cd], (1, 1, d_ff)    f32
    w2_ref, b2_ref,              # (1, d_ff, D)    [cd], (1, 1, D)       f32
    g1_ref, be1_ref,             # (1, 1, D) f32
    o_ref,                       # (rows, D) — residual stream, VMEM-resident across layers
    *, nb_batch, seq, heads, d_k, compute_dtype,
):
    layer = pl.program_id(1)
    cd = compute_dtype
    rows = nb_batch * seq
    hd = heads * d_k

    # First layer of this batch block: seed the resident output block from the input.
    @pl.when(layer == 0)
    def _():
        o_ref[...] = x_ref[...].astype(o_ref.dtype)

    x = o_ref[...].astype(jnp.float32)                 # (rows, D), f32

    # ---------------- multi-head attention ---------------- #
    # Fused QKV projection: one K=D matmul (1/sqrt(d_k) already folded into Q cols).
    qkv = jnp.dot(x.astype(cd), wqkv_ref[0],
                  preferred_element_type=jnp.float32) + bqkv_ref[0]     # (rows, 3*hd) f32

    # Per-head scores / softmax / context.  Head axis stays a static unroll — the
    # head-batched einsum needs a non-minor transpose Mosaic can't lower (see header).
    ctx_parts = []
    for i in range(heads):
        q = qkv[:, i * d_k:(i + 1) * d_k].reshape(nb_batch, seq, d_k)
        k = qkv[:, hd + i * d_k: hd + (i + 1) * d_k].reshape(nb_batch, seq, d_k)
        v = qkv[:, 2 * hd + i * d_k: 2 * hd + (i + 1) * d_k].reshape(nb_batch, seq, d_k)

        s = jnp.einsum('bqd,bkd->bqk', q.astype(cd), k.astype(cd),
                       preferred_element_type=jnp.float32)              # (nb, S, S)
        s = s - jnp.max(s, axis=-1, keepdims=True)
        p = jnp.exp(s)
        # one exact divide per row, broadcast multiply per element
        p = p * (1.0 / jnp.sum(p, axis=-1, keepdims=True))
        c = jnp.einsum('bqk,bkd->bqd', p.astype(cd), v.astype(cd),
                       preferred_element_type=jnp.float32)              # (nb, S, d_k)
        ctx_parts.append(c.reshape(rows, d_k))

    ctx = jnp.concatenate(ctx_parts, axis=-1)                           # (rows, hd)
    mha = jnp.dot(ctx.astype(cd), wo_ref[0],
                  preferred_element_type=jnp.float32) + bo_ref[0]
    # TODO(synk): nn.Dropout layers are identity here (inference semantics).

    def layer_norm(z, g, b):
        # fused single pass: mean and mean-of-squares
        m = jnp.mean(z, axis=-1, keepdims=True)
        var = jnp.maximum(jnp.mean(z * z, axis=-1, keepdims=True) - m * m, 0.0)
        return (z - m) * jax.lax.rsqrt(var + 1e-5) * g + b

    ln0 = layer_norm(mha + x, g0_ref[0], be0_ref[0])

    # ---------------- position-wise FFN ---------------- #
    hid = jnp.dot(ln0.astype(cd), w1_ref[0],
                  preferred_element_type=jnp.float32) + b1_ref[0]
    hid = jnp.maximum(hid, 0.0)
    ffn = jnp.dot(hid.astype(cd), w2_ref[0],
                  preferred_element_type=jnp.float32) + b2_ref[0]

    out = layer_norm(ffn + ln0, g1_ref[0], be1_ref[0])

    # Carry for the next layer; Pallas writes the block to HBM after the last layer
    # of this batch block (output index map is constant over the layer axis).
    o_ref[...] = out.astype(o_ref.dtype)


# ----------------------------- wrapper ------------------------------------ #
_KERNEL_PARAM_ORDER = ("wqkv", "bqkv", "wo", "bo", "g0", "be0",
                       "w1", "b1", "w2", "b2", "g1", "be1")
_MATMUL_WEIGHTS = ("wqkv", "wo", "w1", "w2")   # stored at compute precision (bf16)


def _prep_layer(p):
    """Fuse the per-head q/k/v Linears into one Wqkv and fold the 1/sqrt(d_k) scale."""
    h, d_model, d_k = p["wq"].shape
    scale = 1.0 / math.sqrt(d_k)

    def flat_w(w):      # (h, D, d_k) -> (D, h*d_k), head-major columns
        return jnp.transpose(w, (1, 0, 2)).reshape(d_model, h * d_k)

    def flat_b(b):      # (h, 1, d_k) -> (1, h*d_k), head-major
        return b.reshape(1, h * d_k)

    wqkv = jnp.concatenate(
        [flat_w(p["wq"]) * scale, flat_w(p["wk"]), flat_w(p["wv"])], axis=1)
    bqkv = jnp.concatenate(
        [flat_b(p["bq"]) * scale, flat_b(p["bk"]), flat_b(p["bv"])], axis=1)

    return {"wqkv": wqkv, "bqkv": bqkv, "wo": p["wo"], "bo": p["bo"],
            "g0": p["g0"], "be0": p["be0"], "w1": p["w1"], "b1": p["b1"],
            "w2": p["w2"], "b2": p["b2"], "g1": p["g1"], "be1": p["be1"]}


def _num_tensorcores():
    """Best-effort TensorCore count; defaults to 1 (correct for v5e/v6e)."""
    try:
        dev = jax.devices()[0]
        for attr in ("num_cores", "core_count"):
            v = getattr(dev, attr, None)
            if isinstance(v, int) and v > 0:
                return v
    except Exception:
        pass
    return 1


def encoder_pallas(x, layer_params, *, num_batch_blocks=None,
                   compute_dtype=jnp.bfloat16):
    B, S, D = x.shape
    L = len(layer_params)
    h, _, d_k = layer_params[0]["wq"].shape
    d_ff = layer_params[0]["w1"].shape[1]

    # Stack per-layer params along a leading layer axis; big matmul weights are stored
    # at compute precision (bf16 by default) to halve weight DMA; biases/LN stay f32.
    prepped = [_prep_layer(p) for p in layer_params]
    stacked = {}
    for name in _KERNEL_PARAM_ORDER:
        arr = jnp.stack([pp[name] for pp in prepped])
        if name in _MATMUL_WEIGHTS:
            arr = arr.astype(compute_dtype)
        stacked[name] = arr

    if num_batch_blocks is None:
        # 1 block on single-TC v5e/v6e (each layer's weights streamed once);
        # 2 blocks only when there are two TensorCores (v7x) to keep both busy.
        num_batch_blocks = 2 if (_num_tensorcores() >= 2 and B >= 2 and B % 2 == 0) else 1
    if B % num_batch_blocks != 0:
        num_batch_blocks = 1            # never silently drop rows
    nb_batch = B // num_batch_blocks
    rows = nb_batch * S                 # matmul M dimension (batch folded into rows)

    x2d = x.reshape(B * S, D)

    def w_spec(name):
        arr = stacked[name]
        nrest = arr.ndim - 1
        return pl.BlockSpec((1,) + arr.shape[1:],
                            lambda b, l, _n=nrest: (l,) + (0,) * _n)

    in_specs = [pl.BlockSpec((rows, D), lambda b, l: (b, 0))]   # activation block
    in_specs += [w_spec(name) for name in _KERNEL_PARAM_ORDER]

    # Explicit VMEM budget: double-buffered per-layer weights + activation-side
    # intermediates, clamped so it is safe on v5e/v6e (128 MiB) and v7x (64 MiB).
    wbytes = sum(int(np.prod(stacked[n].shape[1:])) * stacked[n].dtype.itemsize
                 for n in _KERNEL_PARAM_ORDER)
    act_bytes = 4 * rows * (3 * h * d_k + d_ff + 4 * D)
    vmem_limit = int(min(max(3 * wbytes + 2 * act_bytes + (2 << 20), 16 << 20), 48 << 20))

    kernel = functools.partial(encoder_kernel, nb_batch=nb_batch, seq=S,
                               heads=h, d_k=d_k, compute_dtype=compute_dtype)

    out2d = pl.pallas_call(
        kernel,
        out_shape=jax.ShapeDtypeStruct((B * S, D), x.dtype),
        grid=(num_batch_blocks, L),          # (parallel batch blocks, layers)
        in_specs=in_specs,
        out_specs=pl.BlockSpec((rows, D), lambda b, l: (b, 0)),
        compiler_params=pltpu.CompilerParams(
            dimension_semantics=("parallel", "arbitrary"),
            vmem_limit_bytes=vmem_limit),
    )(x2d, *[stacked[name] for name in _KERNEL_PARAM_ORDER])

    return out2d.reshape(B, S, D)


# ----------------------------- reference (pure JAX) ------------------------ #
def sub_encoder_ref(x, p):
    h, _, d_k = p["wq"].shape
    outs = []
    for i in range(h):
        q = x @ p["wq"][i] + p["bq"][i, 0]
        k = x @ p["wk"][i] + p["bk"][i, 0]
        v = x @ p["wv"][i] + p["bv"][i, 0]
        s = jnp.einsum("bqd,bkd->bqk", q, k) / math.sqrt(d_k)
        a = jax.nn.softmax(s, axis=-1)
        outs.append(jnp.einsum("bqk,bkd->bqd", a, v))
    mha = jnp.concatenate(outs, axis=-1) @ p["wo"] + p["bo"][0]

    def layer_norm(z, g, b):
        m = z.mean(-1, keepdims=True)
        v_ = ((z - m) ** 2).mean(-1, keepdims=True)
        return (z - m) / jnp.sqrt(v_ + 1e-5) * g[0] + b[0]

    ln0 = layer_norm(mha + x, p["g0"], p["be0"])
    ffn = jnp.maximum(ln0 @ p["w1"] + p["b1"][0], 0.0) @ p["w2"] + p["b2"][0]
    return layer_norm(ffn + ln0, p["g1"], p["be1"])


def encoder_ref(x, layer_params):
    for p in layer_params:
        x = sub_encoder_ref(x, p)
    return x


# ----------------------------- param init ---------------------------------- #
def _linear(key, out_dim, in_dim):
    kw, kb = jax.random.split(key)
    bound = 1.0 / math.sqrt(in_dim)
    w = jax.random.uniform(kw, (out_dim, in_dim), jnp.float32, -bound, bound)
    b = jax.random.uniform(kb, (out_dim,), jnp.float32, -bound, bound)
    return w, b


def init_sub_encoder(key, h, d_model, d_ff):
    d_k = d_model // h
    keys = jax.random.split(key, 3 * h + 3)
    ki = iter(keys)

    def head_stack():
        ws, bs = [], []
        for _ in range(h):
            w, b = _linear(next(ki), d_k, d_model)   # torch Linear weight: (out, in)
            ws.append(w.T)                           # kernel uses x @ W -> (D, d_k)
            bs.append(b.reshape(1, d_k))
        return jnp.stack(ws), jnp.stack(bs)          # (h, D, d_k), (h, 1, d_k)

    wq, bq = head_stack()
    wk, bk = head_stack()
    wv, bv = head_stack()
    wo_t, bo = _linear(next(ki), d_model, h * d_k)
    w1_t, b1 = _linear(next(ki), d_ff, d_model)
    w2_t, b2 = _linear(next(ki), d_model, d_ff)

    return {
        "wq": wq, "bq": bq, "wk": wk, "bk": bk, "wv": wv, "bv": bv,
        "wo": wo_t.T, "bo": bo.reshape(1, d_model),
        "g0": jnp.ones((1, d_model), jnp.float32),
        "be0": jnp.zeros((1, d_model), jnp.float32),
        "w1": w1_t.T, "b1": b1.reshape(1, d_ff),
        "w2": w2_t.T, "b2": b2.reshape(1, d_model),
        "g1": jnp.ones((1, d_model), jnp.float32),
        "be1": jnp.zeros((1, d_model), jnp.float32),
    }


# ----------------------------- main ---------------------------------------- #
if __name__ == "__main__":
    B, S = 2, 8                      # batch, sequence length
    h, d_model, d_ff = 4, 32, 64     # heads, model dim, ffn dim
    num_sub_encoder = 2

    root = jax.random.PRNGKey(0)
    kx, *layer_keys = jax.random.split(root, num_sub_encoder + 1)
    x = jax.random.normal(kx, (B, S, d_model), jnp.float32)
    layer_params = [init_sub_encoder(k, h, d_model, d_ff) for k in layer_keys]

    ref = jax.block_until_ready(encoder_ref(x, layer_params))

    # f32 matmul path: tight parity with the f32 reference.
    out_f32 = jax.block_until_ready(
        encoder_pallas(x, layer_params, compute_dtype=jnp.float32))
    np.testing.assert_allclose(np.asarray(out_f32), np.asarray(ref),
                               rtol=1e-4, atol=1e-4)

    # default bf16 matmul path (f32 accumulation / LN / softmax): looser tolerance.
    out_bf16 = jax.block_until_ready(encoder_pallas(x, layer_params))
    np.testing.assert_allclose(np.asarray(out_bf16), np.asarray(ref),
                               rtol=5e-2, atol=5e-2)

    print("KERNEL_OK")
</pallas_src>

<mosaic_0001>
module attributes {stable_mosaic.version = 11 : i64} {
  func.func @encoder_kernel(%arg0: i32, %arg1: i32, %arg2: memref<16x32xf32, #tpu.memory_space<vmem>>, %arg3: memref<1x32x96xf32, #tpu.memory_space<vmem>>, %arg4: memref<1x1x96xf32, #tpu.memory_space<vmem>>, %arg5: memref<1x32x32xf32, #tpu.memory_space<vmem>>, %arg6: memref<1x1x32xf32, #tpu.memory_space<vmem>>, %arg7: memref<1x1x32xf32, #tpu.memory_space<vmem>>, %arg8: memref<1x1x32xf32, #tpu.memory_space<vmem>>, %arg9: memref<1x32x64xf32, #tpu.memory_space<vmem>>, %arg10: memref<1x1x64xf32, #tpu.memory_space<vmem>>, %arg11: memref<1x64x32xf32, #tpu.memory_space<vmem>>, %arg12: memref<1x1x32xf32, #tpu.memory_space<vmem>>, %arg13: memref<1x1x32xf32, #tpu.memory_space<vmem>>, %arg14: memref<1x1x32xf32, #tpu.memory_space<vmem>>, %arg15: memref<16x32xf32, #tpu.memory_space<vmem>>) attributes {dimension_semantics = [#tpu.dimension_semantics<parallel>, #tpu.dimension_semantics<arbitrary>], iteration_bounds = array<i64: 1, 2>, scalar_prefetch = 0 : i64, scratch_operands = 0 : i64, tpu.core_type = #tpu.core_type<tc>, window_params = [{transform_indices = @transform_0, window_bounds = array<i64: 16, 32>}, {transform_indices = @transform_1, window_bounds = array<i64: 1, 32, 96>}, {transform_indices = @transform_2, window_bounds = array<i64: 1, 1, 96>}, {transform_indices = @transform_3, window_bounds = array<i64: 1, 32, 32>}, {transform_indices = @transform_4, window_bounds = array<i64: 1, 1, 32>}, {transform_indices = @transform_5, window_bounds = array<i64: 1, 1, 32>}, {transform_indices = @transform_6, window_bounds = array<i64: 1, 1, 32>}, {transform_indices = @transform_7, window_bounds = array<i64: 1, 32, 64>}, {transform_indices = @transform_8, window_bounds = array<i64: 1, 1, 64>}, {transform_indices = @transform_9, window_bounds = array<i64: 1, 64, 32>}, {transform_indices = @transform_10, window_bounds = array<i64: 1, 1, 32>}, {transform_indices = @transform_11, window_bounds = array<i64: 1, 1, 32>}, {transform_indices = @transform_12, window_bounds = array<i64: 1, 1, 32>}, {transform_indices = @transform_13, window_bounds = array<i64: 16, 32>}]} {
    %c0_i32 = arith.constant 0 : i32
    %0 = arith.cmpi eq, %arg1, %c0_i32 : i32
    %1 = arith.extui %0 : i1 to i32
    %c0_i32_0 = arith.constant 0 : i32
    %2 = arith.cmpi ne, %1, %c0_i32_0 : i32
    scf.if %2 {
      %c0_76 = arith.constant 0 : index
      %c0_77 = arith.constant 0 : index
      %174 = vector.load %arg2[%c0_76, %c0_77] : memref<16x32xf32, #tpu.memory_space<vmem>>, vector<16x32xf32>
      %c0_78 = arith.constant 0 : index
      %c0_79 = arith.constant 0 : index
      %175 = vector.load %arg15[%c0_78, %c0_79] : memref<16x32xf32, #tpu.memory_space<vmem>>, vector<16x32xf32>
      tpu.vector_store %arg15[%c0_78, %c0_79], %174 {strides = array<i32>} : memref<16x32xf32, #tpu.memory_space<vmem>>, vector<16x32xf32>,
    } else {
    }
    %c0 = arith.constant 0 : index
    %c0_1 = arith.constant 0 : index
    %3 = vector.load %arg15[%c0, %c0_1] : memref<16x32xf32, #tpu.memory_space<vmem>>, vector<16x32xf32>
    %c0_2 = arith.constant 0 : index
    %c0_3 = arith.constant 0 : index
    %c0_4 = arith.constant 0 : index
    %4 = vector.load %arg3[%c0_2, %c0_3, %c0_4] : memref<1x32x96xf32, #tpu.memory_space<vmem>>, vector<1x32x96xf32>
    %5 = vector.shape_cast %4 : vector<1x32x96xf32> to vector<32x96xf32>
    %cst = arith.constant dense<0.000000e+00> : vector<16x96xf32>
    %6 = tpu.matmul %3, %5, %cst {dimension_numbers = #tpu.dot_dimension_numbers<[1], [0], [0], [1], [0, 0, 1, 1], [], []>} : vector<16x32xf32>, vector<32x96xf32>, vector<16x96xf32> -> vector<16x96xf32>
    %c0_5 = arith.constant 0 : index
    %c0_6 = arith.constant 0 : index
    %c0_7 = arith.constant 0 : index
    %7 = vector.load %arg4[%c0_5, %c0_6, %c0_7] : memref<1x1x96xf32, #tpu.memory_space<vmem>>, vector<1x1x96xf32>
    %8 = vector.shape_cast %7 : vector<1x1x96xf32> to vector<1x96xf32>
    %9 = vector.broadcast %8 : vector<1x96xf32> to vector<16x96xf32>
    %10 = arith.addf %6, %9 : vector<16x96xf32>
    %11 = vector.extract_strided_slice %10 {offsets = [0, 0], sizes = [16, 8], strides = [1, 1]} : vector<16x96xf32> to vector<16x8xf32>
    %12 = vector.shape_cast %11 : vector<16x8xf32> to vector<2x8x8xf32>
    %13 = vector.extract_strided_slice %10 {offsets = [0, 32], sizes = [16, 8], strides = [1, 1]} : vector<16x96xf32> to vector<16x8xf32>
    %14 = vector.shape_cast %13 : vector<16x8xf32> to vector<2x8x8xf32>
    %15 = vector.extract_strided_slice %10 {offsets = [0, 64], sizes = [16, 8], strides = [1, 1]} : vector<16x96xf32> to vector<16x8xf32>
    %16 = vector.shape_cast %15 : vector<16x8xf32> to vector<2x8x8xf32>
    "tpu.trace_start"() <{level = 10 : i32, message = "bqd,bkd->bqk"}> : () -> ()
    %cst_8 = arith.constant dense<0.000000e+00> : vector<2x8x8xf32>
    %17 = tpu.matmul %12, %14, %cst_8 {dimension_numbers = #tpu.dot_dimension_numbers<[2], [2], [1], [1], [0, 0, 0, 1, 1, 1], [0], [0]>} : vector<2x8x8xf32>, vector<2x8x8xf32>, vector<2x8x8xf32> -> vector<2x8x8xf32>
    "tpu.trace_stop"() : () -> ()
    %cst_9 = arith.constant dense<0xFF800000> : vector<2x8xf32>
    %18 = vector.multi_reduction <maximumf>, %17, %cst_9 [2] : vector<2x8x8xf32> to vector<2x8xf32>
    %19 = vector.shape_cast %18 : vector<2x8xf32> to vector<2x8x1xf32>
    %20 = vector.broadcast %19 : vector<2x8x1xf32> to vector<2x8x8xf32>
    %21 = arith.subf %17, %20 : vector<2x8x8xf32>
    %22 = math.exp %21 : vector<2x8x8xf32>
    %cst_10 = arith.constant dense<0.000000e+00> : vector<2x8xf32>
    %23 = vector.multi_reduction <add>, %22, %cst_10 [2] : vector<2x8x8xf32> to vector<2x8xf32>
    %24 = vector.shape_cast %23 : vector<2x8xf32> to vector<2x8x1xf32>
    %cst_11 = arith.constant 1.000000e+00 : f32
    %25 = vector.broadcast %cst_11 : f32 to vector<2x8x1xf32>
    %26 = arith.divf %25, %24 : vector<2x8x1xf32>
    %27 = vector.broadcast %26 : vector<2x8x1xf32> to vector<2x8x8xf32>
    %28 = arith.mulf %22, %27 : vector<2x8x8xf32>
    "tpu.trace_start"() <{level = 10 : i32, message = "bqk,bkd->bqd"}> : () -> ()
    %cst_12 = arith.constant dense<0.000000e+00> : vector<2x8x8xf32>
    %29 = tpu.matmul %28, %16, %cst_12 {dimension_numbers = #tpu.dot_dimension_numbers<[2], [1], [1], [2], [0, 0, 0, 1, 1, 2], [0], [0]>} : vector<2x8x8xf32>, vector<2x8x8xf32>, vector<2x8x8xf32> -> vector<2x8x8xf32>
    "tpu.trace_stop"() : () -> ()
    %30 = vector.shape_cast %29 : vector<2x8x8xf32> to vector<16x8xf32>
    %31 = vector.extract_strided_slice %10 {offsets = [0, 8], sizes = [16, 8], strides = [1, 1]} : vector<16x96xf32> to vector<16x8xf32>
    %32 = vector.shape_cast %31 : vector<16x8xf32> to vector<2x8x8xf32>
    %33 = vector.extract_strided_slice %10 {offsets = [0, 40], sizes = [16, 8], strides = [1, 1]} : vector<16x96xf32> to vector<16x8xf32>
    %34 = vector.shape_cast %33 : vector<16x8xf32> to vector<2x8x8xf32>
    %35 = vector.extract_strided_slice %10 {offsets = [0, 72], sizes = [16, 8], strides = [1, 1]} : vector<16x96xf32> to vector<16x8xf32>
    %36 = vector.shape_cast %35 : vector<16x8xf32> to vector<2x8x8xf32>
    "tpu.trace_start"() <{level = 10 : i32, message = "bqd,bkd->bqk"}> : () -> ()
    %cst_13 = arith.constant dense<0.000000e+00> : vector<2x8x8xf32>
    %37 = tpu.matmul %32, %34, %cst_13 {dimension_numbers = #tpu.dot_dimension_numbers<[2], [2], [1], [1], [0, 0, 0, 1, 1, 1], [0], [0]>} : vector<2x8x8xf32>, vector<2x8x8xf32>, vector<2x8x8xf32> -> vector<2x8x8xf32>
    "tpu.trace_stop"() : () -> ()
    %cst_14 = arith.constant dense<0xFF800000> : vector<2x8xf32>
    %38 = vector.multi_reduction <maximumf>, %37, %cst_14 [2] : vector<2x8x8xf32> to vector<2x8xf32>
    %39 = vector.shape_cast %38 : vector<2x8xf32> to vector<2x8x1xf32>
    %40 = vector.broadcast %39 : vector<2x8x1xf32> to vector<2x8x8xf32>
    %41 = arith.subf %37, %40 : vector<2x8x8xf32>
    %42 = math.exp %41 : vector<2x8x8xf32>
    %cst_15 = arith.constant dense<0.000000e+00> : vector<2x8xf32>
    %43 = vector.multi_reduction <add>, %42, %cst_15 [2] : vector<2x8x8xf32> to vector<2x8xf32>
    %44 = vector.shape_cast %43 : vector<2x8xf32> to vector<2x8x1xf32>
    %cst_16 = arith.constant 1.000000e+00 : f32
    %45 = vector.broadcast %cst_16 : f32 to vector<2x8x1xf32>
    %46 = arith.divf %45, %44 : vector<2x8x1xf32>
    %47 = vector.broadcast %46 : vector<2x8x1xf32> to vector<2x8x8xf32>
    %48 = arith.mulf %42, %47 : vector<2x8x8xf32>
    "tpu.trace_start"() <{level = 10 : i32, message = "bqk,bkd->bqd"}> : () -> ()
    %cst_17 = arith.constant dense<0.000000e+00> : vector<2x8x8xf32>
    %49 = tpu.matmul %48, %36, %cst_17 {dimension_numbers = #tpu.dot_dimension_numbers<[2], [1], [1], [2], [0, 0, 0, 1, 1, 2], [0], [0]>} : vector<2x8x8xf32>, vector<2x8x8xf32>, vector<2x8x8xf32> -> vector<2x8x8xf32>
    "tpu.trace_stop"() : () -> ()
    %50 = vector.shape_cast %49 : vector<2x8x8xf32> to vector<16x8xf32>
    %51 = vector.extract_strided_slice %10 {offsets = [0, 16], sizes = [16, 8], strides = [1, 1]} : vector<16x96xf32> to vector<16x8xf32>
    %52 = vector.shape_cast %51 : vector<16x8xf32> to vector<2x8x8xf32>
    %53 = vector.extract_strided_slice %10 {offsets = [0, 48], sizes = [16, 8], strides = [1, 1]} : vector<16x96xf32> to vector<16x8xf32>
    %54 = vector.shape_cast %53 : vector<16x8xf32> to vector<2x8x8xf32>
    %55 = vector.extract_strided_slice %10 {offsets = [0, 80], sizes = [16, 8], strides = [1, 1]} : vector<16x96xf32> to vector<16x8xf32>
    %56 = vector.shape_cast %55 : vector<16x8xf32> to vector<2x8x8xf32>
    "tpu.trace_start"() <{level = 10 : i32, message = "bqd,bkd->bqk"}> : () -> ()
    %cst_18 = arith.constant dense<0.000000e+00> : vector<2x8x8xf32>
    %57 = tpu.matmul %52, %54, %cst_18 {dimension_numbers = #tpu.dot_dimension_numbers<[2], [2], [1], [1], [0, 0, 0, 1, 1, 1], [0], [0]>} : vector<2x8x8xf32>, vector<2x8x8xf32>, vector<2x8x8xf32> -> vector<2x8x8xf32>
    "tpu.trace_stop"() : () -> ()
    %cst_19 = arith.constant dense<0xFF800000> : vector<2x8xf32>
    %58 = vector.multi_reduction <maximumf>, %57, %cst_19 [2] : vector<2x8x8xf32> to vector<2x8xf32>
    %59 = vector.shape_cast %58 : vector<2x8xf32> to vector<2x8x1xf32>
    %60 = vector.broadcast %59 : vector<2x8x1xf32> to vector<2x8x8xf32>
    %61 = arith.subf %57, %60 : vector<2x8x8xf32>
    %62 = math.exp %61 : vector<2x8x8xf32>
    %cst_20 = arith.constant dense<0.000000e+00> : vector<2x8xf32>
    %63 = vector.multi_reduction <add>, %62, %cst_20 [2] : vector<2x8x8xf32> to vector<2x8xf32>
    %64 = vector.shape_cast %63 : vector<2x8xf32> to vector<2x8x1xf32>
    %cst_21 = arith.constant 1.000000e+00 : f32
    %65 = vector.broadcast %cst_21 : f32 to vector<2x8x1xf32>
    %66 = arith.divf %65, %64 : vector<2x8x1xf32>
    %67 = vector.broadcast %66 : vector<2x8x1xf32> to vector<2x8x8xf32>
    %68 = arith.mulf %62, %67 : vector<2x8x8xf32>
    "tpu.trace_start"() <{level = 10 : i32, message = "bqk,bkd->bqd"}> : () -> ()
    %cst_22 = arith.constant dense<0.000000e+00> : vector<2x8x8xf32>
    %69 = tpu.matmul %68, %56, %cst_22 {dimension_numbers = #tpu.dot_dimension_numbers<[2], [1], [1], [2], [0, 0, 0, 1, 1, 2], [0], [0]>} : vector<2x8x8xf32>, vector<2x8x8xf32>, vector<2x8x8xf32> -> vector<2x8x8xf32>
    "tpu.trace_stop"() : () -> ()
    %70 = vector.shape_cast %69 : vector<2x8x8xf32> to vector<16x8xf32>
    %71 = vector.extract_strided_slice %10 {offsets = [0, 24], sizes = [16, 8], strides = [1, 1]} : vector<16x96xf32> to vector<16x8xf32>
    %72 = vector.shape_cast %71 : vector<16x8xf32> to vector<2x8x8xf32>
    %73 = vector.extract_strided_slice %10 {offsets = [0, 56], sizes = [16, 8], strides = [1, 1]} : vector<16x96xf32> to vector<16x8xf32>
    %74 = vector.shape_cast %73 : vector<16x8xf32> to vector<2x8x8xf32>
    %75 = vector.extract_strided_slice %10 {offsets = [0, 88], sizes = [16, 8], strides = [1, 1]} : vector<16x96xf32> to vector<16x8xf32>
    %76 = vector.shape_cast %75 : vector<16x8xf32> to vector<2x8x8xf32>
    "tpu.trace_start"() <{level = 10 : i32, message = "bqd,bkd->bqk"}> : () -> ()
    %cst_23 = arith.constant dense<0.000000e+00> : vector<2x8x8xf32>
    %77 = tpu.matmul %72, %74, %cst_23 {dimension_numbers = #tpu.dot_dimension_numbers<[2], [2], [1], [1], [0, 0, 0, 1, 1, 1], [0], [0]>} : vector<2x8x8xf32>, vector<2x8x8xf32>, vector<2x8x8xf32> -> vector<2x8x8xf32>
    "tpu.trace_stop"() : () -> ()
    %cst_24 = arith.constant dense<0xFF800000> : vector<2x8xf32>
    %78 = vector.multi_reduction <maximumf>, %77, %cst_24 [2] : vector<2x8x8xf32> to vector<2x8xf32>
    %79 = vector.shape_cast %78 : vector<2x8xf32> to vector<2x8x1xf32>
    %80 = vector.broadcast %79 : vector<2x8x1xf32> to vector<2x8x8xf32>
    %81 = arith.subf %77, %80 : vector<2x8x8xf32>
    %82 = math.exp %81 : vector<2x8x8xf32>
    %cst_25 = arith.constant dense<0.000000e+00> : vector<2x8xf32>
    %83 = vector.multi_reduction <add>, %82, %cst_25 [2] : vector<2x8x8xf32> to vector<2x8xf32>
    %84 = vector.shape_cast %83 : vector<2x8xf32> to vector<2x8x1xf32>
    %cst_26 = arith.constant 1.000000e+00 : f32
    %85 = vector.broadcast %cst_26 : f32 to vector<2x8x1xf32>
    %86 = arith.divf %85, %84 : vector<2x8x1xf32>
    %87 = vector.broadcast %86 : vector<2x8x1xf32> to vector<2x8x8xf32>
    %88 = arith.mulf %82, %87 : vector<2x8x8xf32>
    "tpu.trace_start"() <{level = 10 : i32, message = "bqk,bkd->bqd"}> : () -> ()
    %cst_27 = arith.constant dense<0.000000e+00> : vector<2x8x8xf32>
    %89 = tpu.matmul %88, %76, %cst_27 {dimension_numbers = #tpu.dot_dimension_numbers<[2], [1], [1], [2], [0, 0, 0, 1, 1, 2], [0], [0]>} : vector<2x8x8xf32>, vector<2x8x8xf32>, vector<2x8x8xf32> -> vector<2x8x8xf32>
    "tpu.trace_stop"() : () -> ()
    %90 = vector.shape_cast %89 : vector<2x8x8xf32> to vector<16x8xf32>
    %91 = tpu.concatenate %30, %50, %70, %90 in 1 : vector<16x8xf32>, vector<16x8xf32>, vector<16x8xf32>, vector<16x8xf32> -> vector<16x32xf32>
    %c0_28 = arith.constant 0 : index
    %c0_29 = arith.constant 0 : index
    %c0_30 = arith.constant 0 : index
    %92 = vector.load %arg5[%c0_28, %c0_29, %c0_30] : memref<1x32x32xf32, #tpu.memory_space<vmem>>, vector<1x32x32xf32>
    %93 = vector.shape_cast %92 : vector<1x32x32xf32> to vector<32x32xf32>
    %cst_31 = arith.constant dense<0.000000e+00> : vector<16x32xf32>
    %94 = tpu.matmul %91, %93, %cst_31 {dimension_numbers = #tpu.dot_dimension_numbers<[1], [0], [0], [1], [0, 0, 1, 1], [], []>} : vector<16x32xf32>, vector<32x32xf32>, vector<16x32xf32> -> vector<16x32xf32>
    %c0_32 = arith.constant 0 : index
    %c0_33 = arith.constant 0 : index
    %c0_34 = arith.constant 0 : index
    %95 = vector.load %arg6[%c0_32, %c0_33, %c0_34] : memref<1x1x32xf32, #tpu.memory_space<vmem>>, vector<1x1x32xf32>
    %96 = vector.shape_cast %95 : vector<1x1x32xf32> to vector<1x32xf32>
    %97 = vector.broadcast %96 : vector<1x32xf32> to vector<16x32xf32>
    %98 = arith.addf %94, %97 : vector<16x32xf32>
    %99 = arith.addf %98, %3 : vector<16x32xf32>
    %c0_35 = arith.constant 0 : index
    %c0_36 = arith.constant 0 : index
    %c0_37 = arith.constant 0 : index
    %100 = vector.load %arg7[%c0_35, %c0_36, %c0_37] : memref<1x1x32xf32, #tpu.memory_space<vmem>>, vector<1x1x32xf32>
    %101 = vector.shape_cast %100 : vector<1x1x32xf32> to vector<1x32xf32>
    %c0_38 = arith.constant 0 : index
    %c0_39 = arith.constant 0 : index
    %c0_40 = arith.constant 0 : index
    %102 = vector.load %arg8[%c0_38, %c0_39, %c0_40] : memref<1x1x32xf32, #tpu.memory_space<vmem>>, vector<1x1x32xf32>
    %103 = vector.shape_cast %102 : vector<1x1x32xf32> to vector<1x32xf32>
    %cst_41 = arith.constant dense<0.000000e+00> : vector<16xf32>
    %104 = vector.multi_reduction <add>, %99, %cst_41 [1] : vector<16x32xf32> to vector<16xf32>
    %105 = vector.shape_cast %104 : vector<16xf32> to vector<16x1xf32>
    %cst_42 = arith.constant 3.200000e+01 : f32
    %106 = vector.broadcast %cst_42 : f32 to vector<16x1xf32>
    %107 = arith.divf %105, %106 : vector<16x1xf32>
    %108 = arith.mulf %99, %99 : vector<16x32xf32>
    %cst_43 = arith.constant dense<0.000000e+00> : vector<16xf32>
    %109 = vector.multi_reduction <add>, %108, %cst_43 [1] : vector<16x32xf32> to vector<16xf32>
    %110 = vector.shape_cast %109 : vector<16xf32> to vector<16x1xf32>
    %cst_44 = arith.constant 3.200000e+01 : f32
    %111 = vector.broadcast %cst_44 : f32 to vector<16x1xf32>
    %112 = arith.divf %110, %111 : vector<16x1xf32>
    %113 = arith.mulf %107, %107 : vector<16x1xf32>
    %114 = arith.subf %112, %113 : vector<16x1xf32>
    %cst_45 = arith.constant 0.000000e+00 : f32
    %115 = vector.broadcast %cst_45 : f32 to vector<16x1xf32>
    %116 = arith.maximumf %114, %115 : vector<16x1xf32>
    %117 = vector.broadcast %107 : vector<16x1xf32> to vector<16x32xf32>
    %118 = arith.subf %99, %117 : vector<16x32xf32>
    %cst_46 = arith.constant 9.99999974E-6 : f32
    %119 = vector.broadcast %cst_46 : f32 to vector<16x1xf32>
    %120 = arith.addf %116, %119 : vector<16x1xf32>
    %121 = math.rsqrt %120 : vector<16x1xf32>
    %122 = vector.broadcast %121 : vector<16x1xf32> to vector<16x32xf32>
    %123 = arith.mulf %118, %122 : vector<16x32xf32>
    %124 = vector.broadcast %101 : vector<1x32xf32> to vector<16x32xf32>
    %125 = arith.mulf %123, %124 : vector<16x32xf32>
    %126 = vector.broadcast %103 : vector<1x32xf32> to vector<16x32xf32>
    %127 = arith.addf %125, %126 : vector<16x32xf32>
    %c0_47 = arith.constant 0 : index
    %c0_48 = arith.constant 0 : index
    %c0_49 = arith.constant 0 : index
    %128 = vector.load %arg9[%c0_47, %c0_48, %c0_49] : memref<1x32x64xf32, #tpu.memory_space<vmem>>, vector<1x32x64xf32>
    %129 = vector.shape_cast %128 : vector<1x32x64xf32> to vector<32x64xf32>
    %cst_50 = arith.constant dense<0.000000e+00> : vector<16x64xf32>
    %130 = tpu.matmul %127, %129, %cst_50 {dimension_numbers = #tpu.dot_dimension_numbers<[1], [0], [0], [1], [0, 0, 1, 1], [], []>} : vector<16x32xf32>, vector<32x64xf32>, vector<16x64xf32> -> vector<16x64xf32>
    %c0_51 = arith.constant 0 : index
    %c0_52 = arith.constant 0 : index
    %c0_53 = arith.constant 0 : index
    %131 = vector.load %arg10[%c0_51, %c0_52, %c0_53] : memref<1x1x64xf32, #tpu.memory_space<vmem>>, vector<1x1x64xf32>
    %132 = vector.shape_cast %131 : vector<1x1x64xf32> to vector<1x64xf32>
    %133 = vector.broadcast %132 : vector<1x64xf32> to vector<16x64xf32>
    %134 = arith.addf %130, %133 : vector<16x64xf32>
    %cst_54 = arith.constant 0.000000e+00 : f32
    %135 = vector.broadcast %cst_54 : f32 to vector<16x64xf32>
    %136 = arith.maximumf %134, %135 : vector<16x64xf32>
    %c0_55 = arith.constant 0 : index
    %c0_56 = arith.constant 0 : index
    %c0_57 = arith.constant 0 : index
    %137 = vector.load %arg11[%c0_55, %c0_56, %c0_57] : memref<1x64x32xf32, #tpu.memory_space<vmem>>, vector<1x64x32xf32>
    %138 = vector.shape_cast %137 : vector<1x64x32xf32> to vector<64x32xf32>
    %cst_58 = arith.constant dense<0.000000e+00> : vector<16x32xf32>
    %139 = tpu.matmul %136, %138, %cst_58 {dimension_numbers = #tpu.dot_dimension_numbers<[1], [0], [0], [1], [0, 0, 1, 1], [], []>} : vector<16x64xf32>, vector<64x32xf32>, vector<16x32xf32> -> vector<16x32xf32>
    %c0_59 = arith.constant 0 : index
    %c0_60 = arith.constant 0 : index
    %c0_61 = arith.constant 0 : index
    %140 = vector.load %arg12[%c0_59, %c0_60, %c0_61] : memref<1x1x32xf32, #tpu.memory_space<vmem>>, vector<1x1x32xf32>
    %141 = vector.shape_cast %140 : vector<1x1x32xf32> to vector<1x32xf32>
    %142 = vector.broadcast %141 : vector<1x32xf32> to vector<16x32xf32>
    %143 = arith.addf %139, %142 : vector<16x32xf32>
    %144 = arith.addf %143, %127 : vector<16x32xf32>
    %c0_62 = arith.constant 0 : index
    %c0_63 = arith.constant 0 : index
    %c0_64 = arith.constant 0 : index
    %145 = vector.load %arg13[%c0_62, %c0_63, %c0_64] : memref<1x1x32xf32, #tpu.memory_space<vmem>>, vector<1x1x32xf32>
    %146 = vector.shape_cast %145 : vector<1x1x32xf32> to vector<1x32xf32>
    %c0_65 = arith.constant 0 : index
    %c0_66 = arith.constant 0 : index
    %c0_67 = arith.constant 0 : index
    %147 = vector.load %arg14[%c0_65, %c0_66, %c0_67] : memref<1x1x32xf32, #tpu.memory_space<vmem>>, vector<1x1x32xf32>
    %148 = vector.shape_cast %147 : vector<1x1x32xf32> to vector<1x32xf32>
    %cst_68 = arith.constant dense<0.000000e+00> : vector<16xf32>
    %149 = vector.multi_reduction <add>, %144, %cst_68 [1] : vector<16x32xf32> to vector<16xf32>
    %150 = vector.shape_cast %149 : vector<16xf32> to vector<16x1xf32>
    %cst_69 = arith.constant 3.200000e+01 : f32
    %151 = vector.broadcast %cst_69 : f32 to vector<16x1xf32>
    %152 = arith.divf %150, %151 : vector<16x1xf32>
    %153 = arith.mulf %144, %144 : vector<16x32xf32>
    %cst_70 = arith.constant dense<0.000000e+00> : vector<16xf32>
    %154 = vector.multi_reduction <add>, %153, %cst_70 [1] : vector<16x32xf32> to vector<16xf32>
    %155 = vector.shape_cast %154 : vector<16xf32> to vector<16x1xf32>
    %cst_71 = arith.constant 3.200000e+01 : f32
    %156 = vector.broadcast %cst_71 : f32 to vector<16x1xf32>
    %157 = arith.divf %155, %156 : vector<16x1xf32>
    %158 = arith.mulf %152, %152 : vector<16x1xf32>
    %159 = arith.subf %157, %158 : vector<16x1xf32>
    %cst_72 = arith.constant 0.000000e+00 : f32
    %160 = vector.broadcast %cst_72 : f32 to vector<16x1xf32>
    %161 = arith.maximumf %159, %160 : vector<16x1xf32>
    %162 = vector.broadcast %152 : vector<16x1xf32> to vector<16x32xf32>
    %163 = arith.subf %144, %162 : vector<16x32xf32>
    %cst_73 = arith.constant 9.99999974E-6 : f32
    %164 = vector.broadcast %cst_73 : f32 to vector<16x1xf32>
    %165 = arith.addf %161, %164 : vector<16x1xf32>
    %166 = math.rsqrt %165 : vector<16x1xf32>
    %167 = vector.broadcast %166 : vector<16x1xf32> to vector<16x32xf32>
    %168 = arith.mulf %163, %167 : vector<16x32xf32>
    %169 = vector.broadcast %146 : vector<1x32xf32> to vector<16x32xf32>
    %170 = arith.mulf %168, %169 : vector<16x32xf32>
    %171 = vector.broadcast %148 : vector<1x32xf32> to vector<16x32xf32>
    %172 = arith.addf %170, %171 : vector<16x32xf32>
    %c0_74 = arith.constant 0 : index
    %c0_75 = arith.constant 0 : index
    %173 = vector.load %arg15[%c0_74, %c0_75] : memref<16x32xf32, #tpu.memory_space<vmem>>, vector<16x32xf32>
    tpu.vector_store %arg15[%c0_74, %c0_75], %172 {strides = array<i32>} : memref<16x32xf32, #tpu.memory_space<vmem>>, vector<16x32xf32>,
    return
  }
  func.func @transform_0(%arg0: i32, %arg1: i32) -> (i32, i32) {
    %c0_i32 = arith.constant 0 : i32
    %c0_i32_0 = arith.constant 0 : i32
    return %arg0, %c0_i32 : i32, i32
  }
  func.func @transform_1(%arg0: i32, %arg1: i32) -> (i32, i32, i32) {
    %c0_i32 = arith.constant 0 : i32
    %c0_i32_0 = arith.constant 0 : i32
    %c0_i32_1 = arith.constant 0 : i32
    return %arg1, %c0_i32, %c0_i32_0 : i32, i32, i32
  }
  func.func @transform_2(%arg0: i32, %arg1: i32) -> (i32, i32, i32) {
    %c0_i32 = arith.constant 0 : i32
    %c0_i32_0 = arith.constant 0 : i32
    %c0_i32_1 = arith.constant 0 : i32
    return %arg1, %c0_i32, %c0_i32_0 : i32, i32, i32
  }
  func.func @transform_3(%arg0: i32, %arg1: i32) -> (i32, i32, i32) {
    %c0_i32 = arith.constant 0 : i32
    %c0_i32_0 = arith.constant 0 : i32
    %c0_i32_1 = arith.constant 0 : i32
    return %arg1, %c0_i32, %c0_i32_0 : i32, i32, i32
  }
  func.func @transform_4(%arg0: i32, %arg1: i32) -> (i32, i32, i32) {
    %c0_i32 = arith.constant 0 : i32
    %c0_i32_0 = arith.constant 0 : i32
    %c0_i32_1 = arith.constant 0 : i32
    return %arg1, %c0_i32, %c0_i32_0 : i32, i32, i32
  }
  func.func @transform_5(%arg0: i32, %arg1: i32) -> (i32, i32, i32) {
    %c0_i32 = arith.constant 0 : i32
    %c0_i32_0 = arith.constant 0 : i32
    %c0_i32_1 = arith.constant 0 : i32
    return %arg1, %c0_i32, %c0_i32_0 : i32, i32, i32
  }
  func.func @transform_6(%arg0: i32, %arg1: i32) -> (i32, i32, i32) {
    %c0_i32 = arith.constant 0 : i32
    %c0_i32_0 = arith.constant 0 : i32
    %c0_i32_1 = arith.constant 0 : i32
    return %arg1, %c0_i32, %c0_i32_0 : i32, i32, i32
  }
  func.func @transform_7(%arg0: i32, %arg1: i32) -> (i32, i32, i32) {
    %c0_i32 = arith.constant 0 : i32
    %c0_i32_0 = arith.constant 0 : i32
    %c0_i32_1 = arith.constant 0 : i32
    return %arg1, %c0_i32, %c0_i32_0 : i32, i32, i32
  }
  func.func @transform_8(%arg0: i32, %arg1: i32) -> (i32, i32, i32) {
    %c0_i32 = arith.constant 0 : i32
    %c0_i32_0 = arith.constant 0 : i32
    %c0_i32_1 = arith.constant 0 : i32
    return %arg1, %c0_i32, %c0_i32_0 : i32, i32, i32
  }
  func.func @transform_9(%arg0: i32, %arg1: i32) -> (i32, i32, i32) {
    %c0_i32 = arith.constant 0 : i32
    %c0_i32_0 = arith.constant 0 : i32
    %c0_i32_1 = arith.constant 0 : i32
    return %arg1, %c0_i32, %c0_i32_0 : i32, i32, i32
  }
  func.func @transform_10(%arg0: i32, %arg1: i32) -> (i32, i32, i32) {
    %c0_i32 = arith.constant 0 : i32
    %c0_i32_0 = arith.constant 0 : i32
    %c0_i32_1 = arith.constant 0 : i32
    return %arg1, %c0_i32, %c0_i32_0 : i32, i32, i32
  }
  func.func @transform_11(%arg0: i32, %arg1: i32) -> (i32, i32, i32) {
    %c0_i32 = arith.constant 0 : i32
    %c0_i32_0 = arith.constant 0 : i32
    %c0_i32_1 = arith.constant 0 : i32
    return %arg1, %c0_i32, %c0_i32_0 : i32, i32, i32
  }
  func.func @transform_12(%arg0: i32, %arg1: i32) -> (i32, i32, i32) {
    %c0_i32 = arith.constant 0 : i32
    %c0_i32_0 = arith.constant 0 : i32
    %c0_i32_1 = arith.constant 0 : i32
    return %arg1, %c0_i32, %c0_i32_0 : i32, i32, i32
  }
  func.func @transform_13(%arg0: i32, %arg1: i32) -> (i32, i32) {
    %c0_i32 = arith.constant 0 : i32
    %c0_i32_0 = arith.constant 0 : i32
    return %arg0, %c0_i32 : i32, i32
  }
}

</mosaic_0001>

<llo_original>
// kernel: tpu_custom_call.1
$region0: #{tpu_custom_call.1}
  #allocation0 [shape = 'u32[]', space=smem, size = 0x4, offset = 0x4, fixed_abs, tag = 'smem constant byte address 0x4 - core index']
  #allocation1 [shape = 'u32[144,128]{1,0:T(1,128)}', space=vmem, size = 0x12000, scoped, tag = 'internal scratch']
  %s0 = inlined_call_operand.hbm [shape: f32[16,32], index: 0, kind: input, shape index: {}]
  %s1 = inlined_call_operand.vmem [shape: f32[2,32,96], index: 1, kind: input, shape index: {}]
  %s2 = inlined_call_operand.vmem [shape: f32[2,1,96], index: 2, kind: input, shape index: {}]
  %s3 = inlined_call_operand.vmem [shape: f32[2,32,32], index: 3, kind: input, shape index: {}]
  %s4 = inlined_call_operand.vmem [shape: f32[2,1,32], index: 4, kind: input, shape index: {}]
  %s5 = inlined_call_operand.vmem [shape: f32[2,1,32], index: 5, kind: input, shape index: {}]
  %s6 = inlined_call_operand.vmem [shape: f32[2,1,32], index: 6, kind: input, shape index: {}]
  %s7 = inlined_call_operand.vmem [shape: f32[2,32,64], index: 7, kind: input, shape index: {}]
  %s8 = inlined_call_operand.vmem [shape: f32[2,1,64], index: 8, kind: input, shape index: {}]
  %s9 = inlined_call_operand.vmem [shape: f32[2,64,32], index: 9, kind: input, shape index: {}]
  %s10 = inlined_call_operand.vmem [shape: f32[2,1,32], index: 10, kind: input, shape index: {}]
  %s11 = inlined_call_operand.vmem [shape: f32[2,1,32], index: 11, kind: input, shape index: {}]
  %s12 = inlined_call_operand.vmem [shape: f32[2,1,32], index: 12, kind: input, shape index: {}]
  %s13 = inlined_call_operand.hbm [shape: f32[16,32], index: 13, kind: output, shape index: {}]
  %s14 = sld [smem:[#allocation0]]
  $region93: #{tpu_custom_call.1} parent=0
    _
  %s16 = ssub.s32 1, %s14
  %s17 = scalar_select 0, %s16, %s14
  $region1: #{tpu_custom_call.1} parent=0
    #allocation2 [shape = 'u8[8192]{0}', space=vmem, size = 0x2000, scoped, tag = 'input window, operand 0, single buffered']
    #allocation3 [shape = 's32[2]{0}', space=sflag, size = 0x8, scoped, tag = 'scoped memory for tpu_custom_call.1']
    #allocation4 [shape = 's32[2]{0}', space=sflag, size = 0x8, scoped, tag = 'scoped memory for tpu_custom_call.1']
    #allocation5 [shape = 'u8[8192]{0}', space=vmem, size = 0x2000, scoped, tag = 'output window, operand 0, single buffered']
    %18 = vsyncpa [#allocation3], 0
    %19 = vsyncpa [#allocation4], 0
    loop: start=0, step=1, limit=4
    $region2: #{tpu_custom_call.1} parent=1 // loop_pre_header
      _
    $region3: #{tpu_custom_call.1} parent=1 // loop_header
      %s21 = sphi 0, %s25
      %p22 = scmp.ge.s32.totalorder %s21, 4
      %s28 = sphi 0, %s40
      %s29 = sphi 0, %s36
      %s30 = sphi 0, %s28
      %s31 = sphi 0, %s29
      %s32 = sphi 0, %s30
      %s33 = sphi 0, %s31
      %s43 = sphi 0, %s45
      %s46 = sphi 0, %s43
      %s47 = sphi 0, %s46
      %s63 = sphi 0, %s47
      %s69 = sphi 0, %s71
      %s72 = sphi 0, %s69
      %s73 = sphi 0, %s72
      %s89 = sphi 0, %s73
      %s95 = sphi 0, %s97
      %s98 = sphi 0, %s95
      %s99 = sphi 0, %s98
      %s115 = sphi 0, %s99
      %s121 = sphi 0, %s123
      %s124 = sphi 0, %s121
      %s125 = sphi 0, %s124
      %s141 = sphi 0, %s125
      %s147 = sphi 0, %s149
      %s150 = sphi 0, %s147
      %s151 = sphi 0, %s150
      %s167 = sphi 0, %s151
      %s173 = sphi 0, %s175
      %s176 = sphi 0, %s173
      %s177 = sphi 0, %s176
      %s193 = sphi 0, %s177
      %s199 = sphi 0, %s201
      %s202 = sphi 0, %s199
      %s203 = sphi 0, %s202
      %s219 = sphi 0, %s203
      %s225 = sphi 0, %s227
      %s228 = sphi 0, %s225
      %s229 = sphi 0, %s228
      %s245 = sphi 0, %s229
      %s251 = sphi 0, %s253
      %s254 = sphi 0, %s251
      %s255 = sphi 0, %s254
      %s271 = sphi 0, %s255
      %s277 = sphi 0, %s279
      %s280 = sphi 0, %s277
      %s281 = sphi 0, %s280
      %s297 = sphi 0, %s281
      %s303 = sphi 0, %s305
      %s306 = sphi 0, %s303
      %s307 = sphi 0, %s306
      %s323 = sphi 0, %s307
      %s329 = sphi 0, %s331
      %s332 = sphi 0, %s329
      %s333 = sphi 0, %s332
      %s349 = sphi 0, %s333
      %s355 = sphi 0, %s357
      %s358 = sphi 0, %s355
      %s359 = sphi 0, %s358
      %s375 = sphi 0, %s359
      %s381 = sphi 0, %s383
      %s384 = sphi 0, %s381
      %s385 = sphi 0, %s384
      %s401 = sphi 0, %s385
    $region4: #{tpu_custom_call.1} parent=1 // loop_header_branch
      %24 = sbr.rel (%p22) target = $region8
    $region5: #{tpu_custom_call.1} parent=1 // loop_body
      %s26 = ssub.s32 %s21, 1
      %s27 = ssub.s32 %s21, 2
      %s34 = sadd.s32 1, %s29
      %p35 = scmp.ge.s32.totalorder %s34, 2
      %s36 = scalar_select %p35, 0, %s34
      %s37 = sadd.s32 1, %s28
      %s38 = scalar_select %p35, %s37, %s28
      %p39 = scmp.ge.s32.totalorder %s38, 1
      %s40 = scalar_select %p39, 0, %s38
      %s41 = ssub.s32 %s28, %s40
      %p42 = scmp.eq.s32.totalorder %s41, 0
      %s44 = sadd.s32 %s43, 1
      %s45 = scalar_select %p42, %s43, %s44
      %p48 = pneg %p42
      %p49 = scmp.eq.s32.totalorder %s21, 1
      %p50 = por %p48, %p49
      %p51 = scmp.ne.s32.totalorder %s43, %s46
      %p52 = scmp.eq.s32.totalorder %s21, 0
      %p53 = por %p51, %p52
      %p54 = scmp.ne.s32.totalorder %s43, %s46
      %p55 = scmp.eq.s32.totalorder %s26, 1
      %p56 = por %p54, %p55
      %p57 = scmp.ne.s32.totalorder %s46, %s47
      %p58 = scmp.eq.s32.totalorder %s26, 0
      %p59 = por %p57, %p58
      %p60 = scmp.ne.s32.totalorder %s46, %s47
      %p61 = scmp.eq.s32.totalorder %s27, 1
      %p62 = por %p60, %p61
      %p64 = scmp.ne.s32.totalorder %s47, %s63
      %p65 = scmp.eq.s32.totalorder %s27, 0
      %p66 = por %p64, %p65
      %s67 = ssub.s32 %s29, %s36
      %p68 = scmp.eq.s32.totalorder %s67, 0
      %s70 = sadd.s32 %s69, 1
      %s71 = scalar_select %p68, %s69, %s70
      %p74 = pneg %p68
      %p75 = scmp.eq.s32.totalorder %s21, 1
      %p76 = por %p74, %p75
      %p77 = scmp.ne.s32.totalorder %s69, %s72
      %p78 = scmp.eq.s32.totalorder %s21, 0
      %p79 = por %p77, %p78
      %p80 = scmp.ne.s32.totalorder %s69, %s72
      %p81 = scmp.eq.s32.totalorder %s26, 1
      %p82 = por %p80, %p81
      %p83 = scmp.ne.s32.totalorder %s72, %s73
      %p84 = scmp.eq.s32.totalorder %s26, 0
      %p85 = por %p83, %p84
      %p86 = scmp.ne.s32.totalorder %s72, %s73
      %p87 = scmp.eq.s32.totalorder %s27, 1
      %p88 = por %p86, %p87
      %p90 = scmp.ne.s32.totalorder %s73, %s89
      %p91 = scmp.eq.s32.totalorder %s27, 0
      %p92 = por %p90, %p91
      %s93 = ssub.s32 %s29, %s36
      %p94 = scmp.eq.s32.totalorder %s93, 0
      %s96 = sadd.s32 %s95, 1
      %s97 = scalar_select %p94, %s95, %s96
      %p100 = pneg %p94
      %p101 = scmp.eq.s32.totalorder %s21, 1
      %p102 = por %p100, %p101
      %p103 = scmp.ne.s32.totalorder %s95, %s98
      %p104 = scmp.eq.s32.totalorder %s21, 0
      %p105 = por %p103, %p104
      %p106 = scmp.ne.s32.totalorder %s95, %s98
      %p107 = scmp.eq.s32.totalorder %s26, 1
      %p108 = por %p106, %p107
      %p109 = scmp.ne.s32.totalorder %s98, %s99
      %p110 = scmp.eq.s32.totalorder %s26, 0
      %p111 = por %p109, %p110
      %p112 = scmp.ne.s32.totalorder %s98, %s99
      %p113 = scmp.eq.s32.totalorder %s27, 1
      %p114 = por %p112, %p113
      %p116 = scmp.ne.s32.totalorder %s99, %s115
      %p117 = scmp.eq.s32.totalorder %s27, 0
      %p118 = por %p116, %p117
      %s119 = ssub.s32 %s29, %s36
      %p120 = scmp.eq.s32.totalorder %s119, 0
      %s122 = sadd.s32 %s121, 1
      %s123 = scalar_select %p120, %s121, %s122
      %p126 = pneg %p120
      %p127 = scmp.eq.s32.totalorder %s21, 1
      %p128 = por %p126, %p127
      %p129 = scmp.ne.s32.totalorder %s121, %s124
      %p130 = scmp.eq.s32.totalorder %s21, 0
      %p131 = por %p129, %p130
      %p132 = scmp.ne.s32.totalorder %s121, %s124
      %p133 = scmp.eq.s32.totalorder %s26, 1
      %p134 = por %p132, %p133
      %p135 = scmp.ne.s32.totalorder %s124, %s125
      %p136 = scmp.eq.s32.totalorder %s26, 0
      %p137 = por %p135, %p136
      %p138 = scmp.ne.s32.totalorder %s124, %s125
      %p139 = scmp.eq.s32.totalorder %s27, 1
      %p140 = por %p138, %p139
      %p142 = scmp.ne.s32.totalorder %s125, %s141
      %p143 = scmp.eq.s32.totalorder %s27, 0
      %p144 = por %p142, %p143
      %s145 = ssub.s32 %s29, %s36
      %p146 = scmp.eq.s32.totalorder %s145, 0
      %s148 = sadd.s32 %s147, 1
      %s149 = scalar_select %p146, %s147, %s148
      %p152 = pneg %p146
      %p153 = scmp.eq.s32.totalorder %s21, 1
      %p154 = por %p152, %p153
      %p155 = scmp.ne.s32.totalorder %s147, %s150
      %p156 = scmp.eq.s32.totalorder %s21, 0
      %p157 = por %p155, %p156
      %p158 = scmp.ne.s32.totalorder %s147, %s150
      %p159 = scmp.eq.s32.totalorder %s26, 1
      %p160 = por %p158, %p159
      %p161 = scmp.ne.s32.totalorder %s150, %s151
      %p162 = scmp.eq.s32.totalorder %s26, 0
      %p163 = por %p161, %p162
      %p164 = scmp.ne.s32.totalorder %s150, %s151
      %p165 = scmp.eq.s32.totalorder %s27, 1
      %p166 = por %p164, %p165
      %p168 = scmp.ne.s32.totalorder %s151, %s167
      %p169 = scmp.eq.s32.totalorder %s27, 0
      %p170 = por %p168, %p169
      %s171 = ssub.s32 %s29, %s36
      %p172 = scmp.eq.s32.totalorder %s171, 0
      %s174 = sadd.s32 %s173, 1
      %s175 = scalar_select %p172, %s173, %s174
      %p178 = pneg %p172
      %p179 = scmp.eq.s32.totalorder %s21, 1
      %p180 = por %p178, %p179
      %p181 = scmp.ne.s32.totalorder %s173, %s176
      %p182 = scmp.eq.s32.totalorder %s21, 0
      %p183 = por %p181, %p182
      %p184 = scmp.ne.s32.totalorder %s173, %s176
      %p185 = scmp.eq.s32.totalorder %s26, 1
      %p186 = por %p184, %p185
      %p187 = scmp.ne.s32.totalorder %s176, %s177
      %p188 = scmp.eq.s32.totalorder %s26, 0
      %p189 = por %p187, %p188
      %p190 = scmp.ne.s32.totalorder %s176, %s177
      %p191 = scmp.eq.s32.totalorder %s27, 1
      %p192 = por %p190, %p191
      %p194 = scmp.ne.s32.totalorder %s177, %s193
      %p195 = scmp.eq.s32.totalorder %s27, 0
      %p196 = por %p194, %p195
      %s197 = ssub.s32 %s29, %s36
      %p198 = scmp.eq.s32.totalorder %s197, 0
      %s200 = sadd.s32 %s199, 1
      %s201 = scalar_select %p198, %s199, %s200
      %p204 = pneg %p198
      %p205 = scmp.eq.s32.totalorder %s21, 1
      %p206 = por %p204, %p205
      %p207 = scmp.ne.s32.totalorder %s199, %s202
      %p208 = scmp.eq.s32.totalorder %s21, 0
      %p209 = por %p207, %p208
      %p210 = scmp.ne.s32.totalorder %s199, %s202
      %p211 = scmp.eq.s32.totalorder %s26, 1
      %p212 = por %p210, %p211
      %p213 = scmp.ne.s32.totalorder %s202, %s203
      %p214 = scmp.eq.s32.totalorder %s26, 0
      %p215 = por %p213, %p214
      %p216 = scmp.ne.s32.totalorder %s202, %s203
      %p217 = scmp.eq.s32.totalorder %s27, 1
      %p218 = por %p216, %p217
      %p220 = scmp.ne.s32.totalorder %s203, %s219
      %p221 = scmp.eq.s32.totalorder %s27, 0
      %p222 = por %p220, %p221
      %s223 = ssub.s32 %s29, %s36
      %p224 = scmp.eq.s32.totalorder %s223, 0
      %s226 = sadd.s32 %s225, 1
      %s227 = scalar_select %p224, %s225, %s226
      %p230 = pneg %p224
      %p231 = scmp.eq.s32.totalorder %s21, 1
      %p232 = por %p230, %p231
      %p233 = scmp.ne.s32.totalorder %s225, %s228
      %p234 = scmp.eq.s32.totalorder %s21, 0
      %p235 = por %p233, %p234
      %p236 = scmp.ne.s32.totalorder %s225, %s228
      %p237 = scmp.eq.s32.totalorder %s26, 1
      %p238 = por %p236, %p237
      %p239 = scmp.ne.s32.totalorder %s228, %s229
      %p240 = scmp.eq.s32.totalorder %s26, 0
      %p241 = por %p239, %p240
      %p242 = scmp.ne.s32.totalorder %s228, %s229
      %p243 = scmp.eq.s32.totalorder %s27, 1
      %p244 = por %p242, %p243
      %p246 = scmp.ne.s32.totalorder %s229, %s245
      %p247 = scmp.eq.s32.totalorder %s27, 0
      %p248 = por %p246, %p247
      %s249 = ssub.s32 %s29, %s36
      %p250 = scmp.eq.s32.totalorder %s249, 0
      %s252 = sadd.s32 %s251, 1
      %s253 = scalar_select %p250, %s251, %s252
      %p256 = pneg %p250
      %p257 = scmp.eq.s32.totalorder %s21, 1
      %p258 = por %p256, %p257
      %p259 = scmp.ne.s32.totalorder %s251, %s254
      %p260 = scmp.eq.s32.totalorder %s21, 0
      %p261 = por %p259, %p260
      %p262 = scmp.ne.s32.totalorder %s251, %s254
      %p263 = scmp.eq.s32.totalorder %s26, 1
      %p264 = por %p262, %p263
      %p265 = scmp.ne.s32.totalorder %s254, %s255
      %p266 = scmp.eq.s32.totalorder %s26, 0
      %p267 = por %p265, %p266
      %p268 = scmp.ne.s32.totalorder %s254, %s255
      %p269 = scmp.eq.s32.totalorder %s27, 1
      %p270 = por %p268, %p269
      %p272 = scmp.ne.s32.totalorder %s255, %s271
      %p273 = scmp.eq.s32.totalorder %s27, 0
      %p274 = por %p272, %p273
      %s275 = ssub.s32 %s29, %s36
      %p276 = scmp.eq.s32.totalorder %s275, 0
      %s278 = sadd.s32 %s277, 1
      %s279 = scalar_select %p276, %s277, %s278
      %p282 = pneg %p276
      %p283 = scmp.eq.s32.totalorder %s21, 1
      %p284 = por %p282, %p283
      %p285 = scmp.ne.s32.totalorder %s277, %s280
      %p286 = scmp.eq.s32.totalorder %s21, 0
      %p287 = por %p285, %p286
      %p288 = scmp.ne.s32.totalorder %s277, %s280
      %p289 = scmp.eq.s32.totalorder %s26, 1
      %p290 = por %p288, %p289
      %p291 = scmp.ne.s32.totalorder %s280, %s281
      %p292 = scmp.eq.s32.totalorder %s26, 0
      %p293 = por %p291, %p292
      %p294 = scmp.ne.s32.totalorder %s280, %s281
      %p295 = scmp.eq.s32.totalorder %s27, 1
      %p296 = por %p294, %p295
      %p298 = scmp.ne.s32.totalorder %s281, %s297
      %p299 = scmp.eq.s32.totalorder %s27, 0
      %p300 = por %p298, %p299
      %s301 = ssub.s32 %s29, %s36
      %p302 = scmp.eq.s32.totalorder %s301, 0
      %s304 = sadd.s32 %s303, 1
      %s305 = scalar_select %p302, %s303, %s304
      %p308 = pneg %p302
      %p309 = scmp.eq.s32.totalorder %s21, 1
      %p310 = por %p308, %p309
      %p311 = scmp.ne.s32.totalorder %s303, %s306
      %p312 = scmp.eq.s32.totalorder %s21, 0
      %p313 = por %p311, %p312
      %p314 = scmp.ne.s32.totalorder %s303, %s306
      %p315 = scmp.eq.s32.totalorder %s26, 1
      %p316 = por %p314, %p315
      %p317 = scmp.ne.s32.totalorder %s306, %s307
      %p318 = scmp.eq.s32.totalorder %s26, 0
      %p319 = por %p317, %p318
      %p320 = scmp.ne.s32.totalorder %s306, %s307
      %p321 = scmp.eq.s32.totalorder %s27, 1
      %p322 = por %p320, %p321
      %p324 = scmp.ne.s32.totalorder %s307, %s323
      %p325 = scmp.eq.s32.totalorder %s27, 0
      %p326 = por %p324, %p325
      %s327 = ssub.s32 %s29, %s36
      %p328 = scmp.eq.s32.totalorder %s327, 0
      %s330 = sadd.s32 %s329, 1
      %s331 = scalar_select %p328, %s329, %s330
      %p334 = pneg %p328
      %p335 = scmp.eq.s32.totalorder %s21, 1
      %p336 = por %p334, %p335
      %p337 = scmp.ne.s32.totalorder %s329, %s332
      %p338 = scmp.eq.s32.totalorder %s21, 0
      %p339 = por %p337, %p338
      %p340 = scmp.ne.s32.totalorder %s329, %s332
      %p341 = scmp.eq.s32.totalorder %s26, 1
      %p342 = por %p340, %p341
      %p343 = scmp.ne.s32.totalorder %s332, %s333
      %p344 = scmp.eq.s32.totalorder %s26, 0
      %p345 = por %p343, %p344
      %p346 = scmp.ne.s32.totalorder %s332, %s333
      %p347 = scmp.eq.s32.totalorder %s27, 1
      %p348 = por %p346, %p347
      %p350 = scmp.ne.s32.totalorder %s333, %s349
      %p351 = scmp.eq.s32.totalorder %s27, 0
      %p352 = por %p350, %p351
      %s353 = ssub.s32 %s29, %s36
      %p354 = scmp.eq.s32.totalorder %s353, 0
      %s356 = sadd.s32 %s355, 1
      %s357 = scalar_select %p354, %s355, %s356
      %p360 = pneg %p354
      %p361 = scmp.eq.s32.totalorder %s21, 1
      %p362 = por %p360, %p361
      %p363 = scmp.ne.s32.totalorder %s355, %s358
      %p364 = scmp.eq.s32.totalorder %s21, 0
      %p365 = por %p363, %p364
      %p366 = scmp.ne.s32.totalorder %s355, %s358
      %p367 = scmp.eq.s32.totalorder %s26, 1
      %p368 = por %p366, %p367
      %p369 = scmp.ne.s32.totalorder %s358, %s359
      %p370 = scmp.eq.s32.totalorder %s26, 0
      %p371 = por %p369, %p370
      %p372 = scmp.ne.s32.totalorder %s358, %s359
      %p373 = scmp.eq.s32.totalorder %s27, 1
      %p374 = por %p372, %p373
      %p376 = scmp.ne.s32.totalorder %s359, %s375
      %p377 = scmp.eq.s32.totalorder %s27, 0
      %p378 = por %p376, %p377
      %s379 = ssub.s32 %s28, %s40
      %p380 = scmp.eq.s32.totalorder %s379, 0
      %s382 = sadd.s32 %s381, 1
      %s383 = scalar_select %p380, %s381, %s382
      %p386 = pneg %p380
      %p387 = scmp.eq.s32.totalorder %s21, 1
      %p388 = por %p386, %p387
      %p389 = scmp.ne.s32.totalorder %s381, %s384
      %p390 = scmp.eq.s32.totalorder %s21, 0
      %p391 = por %p389, %p390
      %p392 = scmp.ne.s32.totalorder %s381, %s384
      %p393 = scmp.eq.s32.totalorder %s26, 1
      %p394 = por %p392, %p393
      %p395 = scmp.ne.s32.totalorder %s384, %s385
      %p396 = scmp.eq.s32.totalorder %s26, 0
      %p397 = por %p395, %p396
      %p398 = scmp.ne.s32.totalorder %s384, %s385
      %p399 = scmp.eq.s32.totalorder %s27, 1
      %p400 = por %p398, %p399
      %p402 = scmp.ne.s32.totalorder %s385, %s401
      %p403 = scmp.eq.s32.totalorder %s27, 0
      %p404 = por %p402, %p403
      %p405 = scmp.le.s32.totalorder 1, %s21
      %p406 = scmp.lt.s32.totalorder %s21, 3
      %p407 = pnand %p405, %p406
      %p408 = pneg %p407
      // Predicated region
      $region9: #{tpu_custom_call.1} parent=5 // pred_check
        _
      $region10: #{tpu_custom_call.1} parent=5 // pred_check_branch
        %410 = sbr.rel (%p407) target = $region12
      $region11: #{tpu_custom_call.1} parent=5 // pred_region
        %s411 = ssub.s32 %s21, 1
        // Predicated region
        $region13: #{tpu_custom_call.1} parent=11 // pred_check
          %p412 = pneg %p59
        $region14: #{tpu_custom_call.1} parent=11 // pred_check_branch
          %414 = sbr.rel (%p412) target = $region16
        $region15: #{tpu_custom_call.1} parent=11 // pred_region
          %s415 = smul.u32 2, %s30
          %s417 = ssub.s32 256, 256
          %418 = vsyncadd [#allocation3], %s417
          %s419 = smul.addr %s415, 128
          %s420 = scalar_lea.hbm %s0, %s419
          %s421 = sshll.u32 [#allocation2], 4
          %s422 = int_to_ptr.vmem [resolvable:$true] %s421
          %427 = dma.hbm_to_vmem [thread:$0]  %s420, 256, %s422, [#allocation3], 128, 128, 8
        $region16: #{tpu_custom_call.1} parent=11 // pred_fallthru
          _
      $region12: #{tpu_custom_call.1} parent=5 // pred_fallthru
        _
      %p428 = scmp.lt.s32.totalorder %s21, 2
      // Predicated region
      $region17: #{tpu_custom_call.1} parent=5 // pred_check
        %p429 = pneg %p428
      $region18: #{tpu_custom_call.1} parent=5 // pred_check_branch
        %431 = sbr.rel (%p429) target = $region20
      $region19: #{tpu_custom_call.1} parent=5 // pred_region
        // Predicated region
        $region21: #{tpu_custom_call.1} parent=19 // pred_check
          %p432 = pneg %p79
        $region22: #{tpu_custom_call.1} parent=19 // pred_check_branch
          %434 = sbr.rel (%p432) target = $region24
        $region23: #{tpu_custom_call.1} parent=19 // pred_region
          %p435 = scmp.lt.s32.totalorder %s29, 1
          %s436 = scalar_select %p435, %s29, 1
          %s437 = smul.addr %s436, 4
          %s438 = smul.addr %s437, 8
          %s439 = scalar_lea.vmem %s1, %s438
        $region24: #{tpu_custom_call.1} parent=19 // pred_fallthru
          _
        // Predicated region
        $region25: #{tpu_custom_call.1} parent=19 // pred_check
          %p440 = pneg %p105
        $region26: #{tpu_custom_call.1} parent=19 // pred_check_branch
          %442 = sbr.rel (%p440) target = $region28
        $region27: #{tpu_custom_call.1} parent=19 // pred_region
          %p443 = scmp.lt.s32.totalorder %s29, 1
          %s444 = scalar_select %p443, %s29, 1
          %s445 = scalar_lea.vmem %s2, %s444
        $region28: #{tpu_custom_call.1} parent=19 // pred_fallthru
          _
        // Predicated region
        $region29: #{tpu_custom_call.1} parent=19 // pred_check
          %p446 = pneg %p131
        $region30: #{tpu_custom_call.1} parent=19 // pred_check_branch
          %448 = sbr.rel (%p446) target = $region32
        $region31: #{tpu_custom_call.1} parent=19 // pred_region
          %p449 = scmp.lt.s32.totalorder %s29, 1
          %s450 = scalar_select %p449, %s29, 1
          %s451 = smul.addr %s450, 4
          %s452 = smul.addr %s451, 8
          %s453 = scalar_lea.vmem %s3, %s452
        $region32: #{tpu_custom_call.1} parent=19 // pred_fallthru
          _
        // Predicated region
        $region33: #{tpu_custom_call.1} parent=19 // pred_check
          %p454 = pneg %p157
        $region34: #{tpu_custom_call.1} parent=19 // pred_check_branch
          %456 = sbr.rel (%p454) target = $region36
        $region35: #{tpu_custom_call.1} parent=19 // pred_region
          %p457 = scmp.lt.s32.totalorder %s29, 1
          %s458 = scalar_select %p457, %s29, 1
          %s459 = scalar_lea.vmem %s4, %s458
        $region36: #{tpu_custom_call.1} parent=19 // pred_fallthru
          _
        // Predicated region
        $region37: #{tpu_custom_call.1} parent=19 // pred_check
          %p460 = pneg %p183
        $region38: #{tpu_custom_call.1} parent=19 // pred_check_branch
          %462 = sbr.rel (%p460) target = $region40
        $region39: #{tpu_custom_call.1} parent=19 // pred_region
          %p463 = scmp.lt.s32.totalorder %s29, 1
          %s464 = scalar_select %p463, %s29, 1
          %s465 = scalar_lea.vmem %s5, %s464
        $region40: #{tpu_custom_call.1} parent=19 // pred_fallthru
          _
        // Predicated region
        $region41: #{tpu_custom_call.1} parent=19 // pred_check
          %p466 = pneg %p209
        $region42: #{tpu_custom_call.1} parent=19 // pred_check_branch
          %468 = sbr.rel (%p466) target = $region44
        $region43: #{tpu_custom_call.1} parent=19 // pred_region
          %p469 = scmp.lt.s32.totalorder %s29, 1
          %s470 = scalar_select %p469, %s29, 1
          %s471 = scalar_lea.vmem %s6, %s470
        $region44: #{tpu_custom_call.1} parent=19 // pred_fallthru
          _
        // Predicated region
        $region45: #{tpu_custom_call.1} parent=19 // pred_check
          %p472 = pneg %p235
        $region46: #{tpu_custom_call.1} parent=19 // pred_check_branch
          %474 = sbr.rel (%p472) target = $region48
        $region47: #{tpu_custom_call.1} parent=19 // pred_region
          %p475 = scmp.lt.s32.totalorder %s29, 1
          %s476 = scalar_select %p475, %s29, 1
          %s477 = smul.addr %s476, 4
          %s478 = smul.addr %s477, 8
          %s479 = scalar_lea.vmem %s7, %s478
        $region48: #{tpu_custom_call.1} parent=19 // pred_fallthru
          _
        // Predicated region
        $region49: #{tpu_custom_call.1} parent=19 // pred_check
          %p480 = pneg %p261
        $region50: #{tpu_custom_call.1} parent=19 // pred_check_branch
          %482 = sbr.rel (%p480) target = $region52
        $region51: #{tpu_custom_call.1} parent=19 // pred_region
          %p483 = scmp.lt.s32.totalorder %s29, 1
          %s484 = scalar_select %p483, %s29, 1
          %s485 = scalar_lea.vmem %s8, %s484
        $region52: #{tpu_custom_call.1} parent=19 // pred_fallthru
          _
        // Predicated region
        $region53: #{tpu_custom_call.1} parent=19 // pred_check
          %p486 = pneg %p287
        $region54: #{tpu_custom_call.1} parent=19 // pred_check_branch
          %488 = sbr.rel (%p486) target = $region56
        $region55: #{tpu_custom_call.1} parent=19 // pred_region
          %p489 = scmp.lt.s32.totalorder %s29, 1
          %s490 = scalar_select %p489, %s29, 1
          %s491 = smul.addr %s490, 8
          %s492 = smul.addr %s491, 8
          %s493 = scalar_lea.vmem %s9, %s492
        $region56: #{tpu_custom_call.1} parent=19 // pred_fallthru
          _
        // Predicated region
        $region57: #{tpu_custom_call.1} parent=19 // pred_check
          %p494 = pneg %p313
        $region58: #{tpu_custom_call.1} parent=19 // pred_check_branch
          %496 = sbr.rel (%p494) target = $region60
        $region59: #{tpu_custom_call.1} parent=19 // pred_region
          %p497 = scmp.lt.s32.totalorder %s29, 1
          %s498 = scalar_select %p497, %s29, 1
          %s499 = scalar_lea.vmem %s10, %s498
        $region60: #{tpu_custom_call.1} parent=19 // pred_fallthru
          _
        // Predicated region
        $region61: #{tpu_custom_call.1} parent=19 // pred_check
          %p500 = pneg %p339
        $region62: #{tpu_custom_call.1} parent=19 // pred_check_branch
          %502 = sbr.rel (%p500) target = $region64
        $region63: #{tpu_custom_call.1} parent=19 // pred_region
          %p503 = scmp.lt.s32.totalorder %s29, 1
          %s504 = scalar_select %p503, %s29, 1
          %s505 = scalar_lea.vmem %s11, %s504
        $region64: #{tpu_custom_call.1} parent=19 // pred_fallthru
          _
        // Predicated region
        $region65: #{tpu_custom_call.1} parent=19 // pred_check
          %p506 = pneg %p365
        $region66: #{tpu_custom_call.1} parent=19 // pred_check_branch
          %508 = sbr.rel (%p506) target = $region68
        $region67: #{tpu_custom_call.1} parent=19 // pred_region
          %p509 = scmp.lt.s32.totalorder %s29, 1
          %s510 = scalar_select %p509, %s29, 1
          %s511 = scalar_lea.vmem %s12, %s510
        $region68: #{tpu_custom_call.1} parent=19 // pred_fallthru
          _
      $region20: #{tpu_custom_call.1} parent=5 // pred_fallthru
        _
      %p512 = scmp.le.s32.totalorder 1, %s21
      %p513 = scmp.lt.s32.totalorder %s21, 3
      %p514 = pnand %p512, %p513
      %p515 = pneg %p514
      // Predicated region
      $region69: #{tpu_custom_call.1} parent=5 // pred_check
        _
      $region70: #{tpu_custom_call.1} parent=5 // pred_check_branch
        %517 = sbr.rel (%p514) target = $region72
      $region71: #{tpu_custom_call.1} parent=5 // pred_region
        %s518 = ssub.s32 %s21, 1
        // Predicated region
        $region73: #{tpu_custom_call.1} parent=71 // pred_check
          %p519 = pneg %p59
        $region74: #{tpu_custom_call.1} parent=71 // pred_check_branch
          %521 = sbr.rel (%p519) target = $region76
        $region75: #{tpu_custom_call.1} parent=71 // pred_region
          %522 = dma.done [#allocation3], 256
        $region76: #{tpu_custom_call.1} parent=71 // pred_fallthru
          _
        %p523 = pneg %p59
        %p524 = pneg %p56
        %p525 = scmp.lt.s32.totalorder %s31, 1
        %s526 = scalar_select %p525, %s31, 1
        %s527 = smul.addr %s526, 4
        %s528 = smul.addr %s527, 8
        %s529 = scalar_lea.vmem %s1, %s528
        %p530 = pneg %p85
        %p531 = pneg %p82
        %p532 = scmp.lt.s32.totalorder %s31, 1
        %s533 = scalar_select %p532, %s31, 1
        %s534 = scalar_lea.vmem %s2, %s533
        %p535 = pneg %p111
        %p536 = pneg %p108
        %p537 = scmp.lt.s32.totalorder %s31, 1
        %s538 = scalar_select %p537, %s31, 1
        %s539 = smul.addr %s538, 4
        %s540 = smul.addr %s539, 8
        %s541 = scalar_lea.vmem %s3, %s540
        %p542 = pneg %p137
        %p543 = pneg %p134
        %p544 = scmp.lt.s32.totalorder %s31, 1
        %s545 = scalar_select %p544, %s31, 1
        %s546 = scalar_lea.vmem %s4, %s545
        %p547 = pneg %p163
        %p548 = pneg %p160
        %p549 = scmp.lt.s32.totalorder %s31, 1
        %s550 = scalar_select %p549, %s31, 1
        %s551 = scalar_lea.vmem %s5, %s550
        %p552 = pneg %p189
        %p553 = pneg %p186
        %p554 = scmp.lt.s32.totalorder %s31, 1
        %s555 = scalar_select %p554, %s31, 1
        %s556 = scalar_lea.vmem %s6, %s555
        %p557 = pneg %p215
        %p558 = pneg %p212
        %p559 = scmp.lt.s32.totalorder %s31, 1
        %s560 = scalar_select %p559, %s31, 1
        %s561 = smul.addr %s560, 4
        %s562 = smul.addr %s561, 8
        %s563 = scalar_lea.vmem %s7, %s562
        %p564 = pneg %p241
        %p565 = pneg %p238
        %p566 = scmp.lt.s32.totalorder %s31, 1
        %s567 = scalar_select %p566, %s31, 1
        %s568 = scalar_lea.vmem %s8, %s567
        %p569 = pneg %p267
        %p570 = pneg %p264
        %p571 = scmp.lt.s32.totalorder %s31, 1
        %s572 = scalar_select %p571, %s31, 1
        %s573 = smul.addr %s572, 8
        %s574 = smul.addr %s573, 8
        %s575 = scalar_lea.vmem %s9, %s574
        %p576 = pneg %p293
        %p577 = pneg %p290
        %p578 = scmp.lt.s32.totalorder %s31, 1
        %s579 = scalar_select %p578, %s31, 1
        %s580 = scalar_lea.vmem %s10, %s579
        %p581 = pneg %p319
        %p582 = pneg %p316
        %p583 = scmp.lt.s32.totalorder %s31, 1
        %s584 = scalar_select %p583, %s31, 1
        %s585 = scalar_lea.vmem %s11, %s584
        %p586 = pneg %p345
        %p587 = pneg %p342
        %p588 = scmp.lt.s32.totalorder %s31, 1
        %s589 = scalar_select %p588, %s31, 1
        %s590 = scalar_lea.vmem %s12, %s589
        %p591 = pneg %p371
        %p592 = pneg %p368
        %p593 = pneg %p397
        %p594 = pneg %p394
        %s595 = smul.u32 2, %s30
        %p596 = scmp.lt.s32.totalorder %s31, 1
        %s597 = scalar_select %p596, %s31, 1
        %s598 = smul.addr %s597, 4
        %s599 = smul.addr %s598, 8
        %s600 = scalar_lea.vmem %s1, %s599
        %p601 = scmp.lt.s32.totalorder %s31, 1
        %s602 = scalar_select %p601, %s31, 1
        %s603 = scalar_lea.vmem %s2, %s602
        %p604 = scmp.lt.s32.totalorder %s31, 1
        %s605 = scalar_select %p604, %s31, 1
        %s606 = smul.addr %s605, 4
        %s607 = smul.addr %s606, 8
        %s608 = scalar_lea.vmem %s3, %s607
        %p609 = scmp.lt.s32.totalorder %s31, 1
        %s610 = scalar_select %p609, %s31, 1
        %s611 = scalar_lea.vmem %s4, %s610
        %p612 = scmp.lt.s32.totalorder %s31, 1
        %s613 = scalar_select %p612, %s31, 1
        %s614 = scalar_lea.vmem %s5, %s613
        %p615 = scmp.lt.s32.totalorder %s31, 1
        %s616 = scalar_select %p615, %s31, 1
        %s617 = scalar_lea.vmem %s6, %s616
        %p618 = scmp.lt.s32.totalorder %s31, 1
        %s619 = scalar_select %p618, %s31, 1
        %s620 = smul.addr %s619, 4
        %s621 = smul.addr %s620, 8
        %s622 = scalar_lea.vmem %s7, %s621
        %p623 = scmp.lt.s32.totalorder %s31, 1
        %s624 = scalar_select %p623, %s31, 1
        %s625 = scalar_lea.vmem %s8, %s624
        %p626 = scmp.lt.s32.totalorder %s31, 1
        %s627 = scalar_select %p626, %s31, 1
        %s628 = smul.addr %s627, 8
        %s629 = smul.addr %s628, 8
        %s630 = scalar_lea.vmem %s9, %s629
        %p631 = scmp.lt.s32.totalorder %s31, 1
        %s632 = scalar_select %p631, %s31, 1
        %s633 = scalar_lea.vmem %s10, %s632
        %p634 = scmp.lt.s32.totalorder %s31, 1
        %s635 = scalar_select %p634, %s31, 1
        %s636 = scalar_lea.vmem %s11, %s635
        %p637 = scmp.lt.s32.totalorder %s31, 1
        %s638 = scalar_select %p637, %s31, 1
        %s639 = scalar_lea.vmem %s12, %s638
        %s640 = smul.u32 2, %s30
        %p641 = scmp.eq.s32.totalorder %s31, 0
        // Predicated region
        $region77: #{tpu_custom_call.1} parent=71 // pred_check
          %p642 = pneg %p641
        $region78: #{tpu_custom_call.1} parent=71 // pred_check_branch
          %644 = sbr.rel (%p642) target = $region80
        $region79: #{tpu_custom_call.1} parent=71 // pred_region
          %v645 = vld [vmem:[#allocation2] sm:$0xff]
          %v646 = vld [vmem:[#allocation2 + $0x8] sm:$0xff]
          %vm647 = vcmask 261120
          %648 = vst.msk [vmem:[#allocation5] sm:$0xff] %vm647, %v645
          %649 = vst.msk [vmem:[#allocation5 + $0x8] sm:$0xff] %vm647, %v646
        $region80: #{tpu_custom_call.1} parent=71 // pred_fallthru
          _
        %v650 = vld [vmem:[#allocation5] sm:$0xff]
        %v651 = vld [vmem:[#allocation5 + $0x8] sm:$0xff]
        %v652 = vld [vmem:[%s600] sm:$0xff]
        %v653 = vld [vmem:[%s600 + $0x8] sm:$0xff]
        %v654 = vld [vmem:[%s600 + $0x10] sm:$0xff]
        %v655 = vld [vmem:[%s600 + $0x18] sm:$0xff]
        %v656 = vld [vmem:[%s603] sm:$0x1]
        %v658 = vlaneseq
        %v659 = vshrl.u32 %v658, 7
        %v660 = vsub.s32 0, %v659
        %v661 = vrot.slane %v656, %v660
        %vm663 = vcmask 261120
        %v665 = vsel %vm663, %v650, 0
        %v668 = vsel %vm663, %v651, 0
        %670 = vmatprep.subr.mxu0 0.0
        %671 = vmatpush1.msra.mxu0 0.0
        %672 = vmatprep.subr.mxu0 0.0
        %673 = vmatpush1.msra.mxu0 0.0
        %674 = vmatprep.subr.mxu0 0.0
        %675 = vmatpush1.msra.mxu0 0.0
        %676 = vmatprep.subr.mxu0 0.0
        %677 = vmatpush1.msra.mxu0 0.0
        %678 = vmatprep.subr.mxu0 0.0
        %679 = vmatpush1.msra.mxu0 0.0
        %680 = vmatprep.subr.mxu0 0.0
        %681 = vmatpush1.msra.mxu0 0.0
        %682 = vmatprep.subr.mxu0 0.0
        %683 = vmatpush1.msra.mxu0 0.0
        %684 = vmatprep.subr.mxu0 0.0
        %685 = vmatpush1.msra.mxu0 0.0
        %686 = vmatprep.subr.mxu0 0.0
        %687 = vmatpush1.msra.mxu0 0.0
        %688 = vmatprep.subr.mxu0 0.0
        %689 = vmatpush1.msra.mxu0 0.0
        %690 = vmatprep.subr.mxu0 0.0
        %691 = vmatpush1.msra.mxu0 0.0
        %692 = vmatprep.subr.mxu0 0.0
        %693 = vmatpush1.msra.mxu0 0.0
        %694 = vmatprep.subr.mxu0 0.0
        %695 = vmatpush1.msra.mxu0 %v655
        %696 = vmatprep.subr.mxu0 0.0
        %697 = vmatpush1.msra.mxu0 %v654
        %698 = vmatprep.subr.mxu0 0.0
        %699 = vmatpush1.msra.mxu0 %v653
        %700 = vmatprep.subr.mxu0 0.0
        %701 = vmatpush1.msra.mxu0 %v652
        %702 = vmatprep.subr.mxu0 0.0
        %703 = vmatpush2.msra.mxu0 0.0
        %704 = vmatprep.subr.mxu0 0.0
        %705 = vmatpush2.msra.mxu0 0.0
        %706 = vmatprep.subr.mxu0 0.0
        %707 = vmatpush2.msra.mxu0 0.0
        %708 = vmatprep.subr.mxu0 0.0
        %709 = vmatpush2.msra.mxu0 0.0
        %710 = vmatprep.subr.mxu0 0.0
        %711 = vmatpush2.msra.mxu0 0.0
        %712 = vmatprep.subr.mxu0 0.0
        %713 = vmatpush2.msra.mxu0 0.0
        %714 = vmatprep.subr.mxu0 0.0
        %715 = vmatpush2.msra.mxu0 0.0
        %716 = vmatprep.subr.mxu0 0.0
        %717 = vmatpush2.msra.mxu0 0.0
        %718 = vmatprep.subr.mxu0 0.0
        %719 = vmatpush2.msra.mxu0 0.0
        %720 = vmatprep.subr.mxu0 0.0
        %721 = vmatpush2.msra.mxu0 0.0
        %722 = vmatprep.subr.mxu0 0.0
        %723 = vmatpush2.msra.mxu0 0.0
        %724 = vmatprep.subr.mxu0 0.0
        %725 = vmatpush2.msra.mxu0 0.0
        %726 = vmatprep.subr.mxu0 0.0
        %727 = vmatpush2.msra.mxu0 0.0
        %728 = vmatprep.subr.mxu0 0.0
        %729 = vmatpush2.msra.mxu0 0.0
        %730 = vmatprep.subr.mxu0 0.0
        %731 = vmatpush2.msra.mxu0 0.0
        %732 = vmatprep.subr.mxu0 0.0
        %733 = vmatpush2.msra.mxu0 0.0
        %734 = vmatprep.mubr.f32.mxu0 0.0
        %735 = vmatmul.mubr.f32.gmra.mxu0 %v665
        %v736 = vpop.f32.mrf.mxu0
        %v737 = vadd.f32 %v661, %v736
        %v738 = vpop.f32.mrf.mxu0
        %739 = vmatprep.mubr.f32.mxu0 0.0
        %740 = vmatmul.mubr.f32.gmra.mxu0 %v668
        %v741 = vpop.f32.mrf.mxu0
        %v742 = vadd.f32 %v661, %v741
        %v743 = vpop.f32.mrf.mxu0
        %744 = vdwg.mxu0
        %746 = vrot.lane.b32.xlu0 %v737, 96
        %v747 = vpop.permute.xlu0 %746
        %vm748 = vcmask 64512
        %v749 = vsel %vm748, %v737, 0
        %v751 = vsel %vm748, %v747, 0
        %753 = vmatprep.subr.mxu0 0.0
        %754 = vmatpush1.xpose.msra.mxu0 0.0
        %755 = vmatprep.subr.mxu0 0.0
        %756 = vmatpush1.xpose.msra.mxu0 0.0
        %757 = vmatprep.subr.mxu0 0.0
        %758 = vmatpush1.xpose.msra.mxu0 0.0
        %759 = vmatprep.subr.mxu0 0.0
        %760 = vmatpush1.xpose.msra.mxu0 0.0
        %761 = vmatprep.subr.mxu0 0.0
        %762 = vmatpush1.xpose.msra.mxu0 0.0
        %763 = vmatprep.subr.mxu0 0.0
        %764 = vmatpush1.xpose.msra.mxu0 0.0
        %765 = vmatprep.subr.mxu0 0.0
        %766 = vmatpush1.xpose.msra.mxu0 0.0
        %767 = vmatprep.subr.mxu0 0.0
        %768 = vmatpush1.xpose.msra.mxu0 0.0
        %769 = vmatprep.subr.mxu0 0.0
        %770 = vmatpush1.xpose.msra.mxu0 0.0
        %771 = vmatprep.subr.mxu0 0.0
        %772 = vmatpush1.xpose.msra.mxu0 0.0
        %773 = vmatprep.subr.mxu0 0.0
        %774 = vmatpush1.xpose.msra.mxu0 0.0
        %775 = vmatprep.subr.mxu0 0.0
        %776 = vmatpush1.xpose.msra.mxu0 0.0
        %777 = vmatprep.subr.mxu0 0.0
        %778 = vmatpush1.xpose.msra.mxu0 0.0
        %779 = vmatprep.subr.mxu0 0.0
        %780 = vmatpush1.xpose.msra.mxu0 0.0
        %781 = vmatprep.subr.mxu0 0.0
        %782 = vmatpush1.xpose.msra.mxu0 0.0
        %783 = vmatprep.subr.mxu0 0.0
        %784 = vmatpush1.xpose.msra.mxu0 %v751
        %785 = vmatprep.subr.mxu0 0.0
        %786 = vmatpush2.xpose.msra.mxu0 0.0
        %787 = vmatprep.subr.mxu0 0.0
        %788 = vmatpush2.xpose.msra.mxu0 0.0
        %789 = vmatprep.subr.mxu0 0.0
        %790 = vmatpush2.xpose.msra.mxu0 0.0
        %791 = vmatprep.subr.mxu0 0.0
        %792 = vmatpush2.xpose.msra.mxu0 0.0
        %793 = vmatprep.subr.mxu0 0.0
        %794 = vmatpush2.xpose.msra.mxu0 0.0
        %795 = vmatprep.subr.mxu0 0.0
        %796 = vmatpush2.xpose.msra.mxu0 0.0
        %797 = vmatprep.subr.mxu0 0.0
        %798 = vmatpush2.xpose.msra.mxu0 0.0
        %799 = vmatprep.subr.mxu0 0.0
        %800 = vmatpush2.xpose.msra.mxu0 0.0
        %801 = vmatprep.subr.mxu0 0.0
        %802 = vmatpush2.xpose.msra.mxu0 0.0
        %803 = vmatprep.subr.mxu0 0.0
        %804 = vmatpush2.xpose.msra.mxu0 0.0
        %805 = vmatprep.subr.mxu0 0.0
        %806 = vmatpush2.xpose.msra.mxu0 0.0
        %807 = vmatprep.subr.mxu0 0.0
        %808 = vmatpush2.xpose.msra.mxu0 0.0
        %809 = vmatprep.subr.mxu0 0.0
        %810 = vmatpush2.xpose.msra.mxu0 0.0
        %811 = vmatprep.subr.mxu0 0.0
        %812 = vmatpush2.xpose.msra.mxu0 0.0
        %813 = vmatprep.subr.mxu0 0.0
        %814 = vmatpush2.xpose.msra.mxu0 0.0
        %815 = vmatprep.subr.mxu0 0.0
        %816 = vmatpush2.xpose.msra.mxu0 0.0
        %817 = vmatprep.mubr.f32.mxu0 0.0
        %818 = vmatmul.mubr.f32.gmra.mxu0 %v749
        %v819 = vpop.f32.mrf.mxu0
        %v820 = vadd.f32 0.0, %v819
        %v821 = vpop.f32.mrf.mxu0
        %822 = vdwg.mxu0
        %824 = vrot.lane.b32.xlu0 %v742, 96
        %v825 = vpop.permute.xlu0 %824
        %v826 = vsel %vm748, %v742, 0
        %v828 = vsel %vm748, %v825, 0
        %830 = vmatprep.subr.mxu0 0.0
        %831 = vmatpush1.xpose.msra.mxu0 0.0
        %832 = vmatprep.subr.mxu0 0.0
        %833 = vmatpush1.xpose.msra.mxu0 0.0
        %834 = vmatprep.subr.mxu0 0.0
        %835 = vmatpush1.xpose.msra.mxu0 0.0
        %836 = vmatprep.subr.mxu0 0.0
        %837 = vmatpush1.xpose.msra.mxu0 0.0
        %838 = vmatprep.subr.mxu0 0.0
        %839 = vmatpush1.xpose.msra.mxu0 0.0
        %840 = vmatprep.subr.mxu0 0.0
        %841 = vmatpush1.xpose.msra.mxu0 0.0
        %842 = vmatprep.subr.mxu0 0.0
        %843 = vmatpush1.xpose.msra.mxu0 0.0
        %844 = vmatprep.subr.mxu0 0.0
        %845 = vmatpush1.xpose.msra.mxu0 0.0
        %846 = vmatprep.subr.mxu0 0.0
        %847 = vmatpush1.xpose.msra.mxu0 0.0
        %848 = vmatprep.subr.mxu0 0.0
        %849 = vmatpush1.xpose.msra.mxu0 0.0
        %850 = vmatprep.subr.mxu0 0.0
        %851 = vmatpush1.xpose.msra.mxu0 0.0
        %852 = vmatprep.subr.mxu0 0.0
        %853 = vmatpush1.xpose.msra.mxu0 0.0
        %854 = vmatprep.subr.mxu0 0.0
        %855 = vmatpush1.xpose.msra.mxu0 0.0
        %856 = vmatprep.subr.mxu0 0.0
        %857 = vmatpush1.xpose.msra.mxu0 0.0
        %858 = vmatprep.subr.mxu0 0.0
        %859 = vmatpush1.xpose.msra.mxu0 0.0
        %860 = vmatprep.subr.mxu0 0.0
        %861 = vmatpush1.xpose.msra.mxu0 %v828
        %862 = vmatprep.subr.mxu0 0.0
        %863 = vmatpush2.xpose.msra.mxu0 0.0
        %864 = vmatprep.subr.mxu0 0.0
        %865 = vmatpush2.xpose.msra.mxu0 0.0
        %866 = vmatprep.subr.mxu0 0.0
        %867 = vmatpush2.xpose.msra.mxu0 0.0
        %868 = vmatprep.subr.mxu0 0.0
        %869 = vmatpush2.xpose.msra.mxu0 0.0
        %870 = vmatprep.subr.mxu0 0.0
        %871 = vmatpush2.xpose.msra.mxu0 0.0
        %872 = vmatprep.subr.mxu0 0.0
        %873 = vmatpush2.xpose.msra.mxu0 0.0
        %874 = vmatprep.subr.mxu0 0.0
        %875 = vmatpush2.xpose.msra.mxu0 0.0
        %876 = vmatprep.subr.mxu0 0.0
        %877 = vmatpush2.xpose.msra.mxu0 0.0
        %878 = vmatprep.subr.mxu0 0.0
        %879 = vmatpush2.xpose.msra.mxu0 0.0
        %880 = vmatprep.subr.mxu0 0.0
        %881 = vmatpush2.xpose.msra.mxu0 0.0
        %882 = vmatprep.subr.mxu0 0.0
        %883 = vmatpush2.xpose.msra.mxu0 0.0
        %884 = vmatprep.subr.mxu0 0.0
        %885 = vmatpush2.xpose.msra.mxu0 0.0
        %886 = vmatprep.subr.mxu0 0.0
        %887 = vmatpush2.xpose.msra.mxu0 0.0
        %888 = vmatprep.subr.mxu0 0.0
        %889 = vmatpush2.xpose.msra.mxu0 0.0
        %890 = vmatprep.subr.mxu0 0.0
        %891 = vmatpush2.xpose.msra.mxu0 0.0
        %892 = vmatprep.subr.mxu0 0.0
        %893 = vmatpush2.xpose.msra.mxu0 0.0
        %894 = vmatprep.mubr.f32.mxu0 0.0
        %895 = vmatmul.mubr.f32.gmra.mxu0 %v826
        %v896 = vpop.f32.mrf.mxu0
        %v897 = vadd.f32 0.0, %v896
        %v898 = vpop.f32.mrf.mxu0
        %899 = vdwg.mxu0
        %v900 = vsel %vm748, %v820, -inf
        %901 = vmax.xlane.f32.xlu0 %v900
        %v902 = vpop.xlane.xlu0 %901
        %v903 = vsel %vm748, %v897, -inf
        %904 = vmax.xlane.f32.xlu0 %v903
        %v905 = vpop.xlane.xlu0 %904
        %v906 = vsub.f32 %v820, %v902
        %v907 = vsub.f32 %v897, %v905
        %v908 = vmul.f32 %v906, 1.442695
        %v909 = vpow.pop %v908
        %v910 = vmul.f32 %v907, 1.442695
        %v911 = vpow.pop %v910
        %v912 = vsel %vm748, %v909, 0.0
        %913 = vadd.xlane.f32.xlu0 %v912
        %v914 = vpop.xlane.xlu0 %913
        %v915 = vsel %vm748, %v911, 0.0
        %916 = vadd.xlane.f32.xlu0 %v915
        %v917 = vpop.xlane.xlu0 %916
        %v918 = vrcp.pop %v914
        %v919 = vmul.f32 1.0, %v918
        %v920 = vrcp.pop %v917
        %v921 = vmul.f32 1.0, %v920
        %v922 = vmul.f32 %v909, %v919
        %v923 = vmul.f32 %v911, %v921
        %924 = vrot.lane.b32.xlu0 %v737, 64
        %v925 = vpop.permute.xlu0 %924
        %v928 = vsel %vm748, %v922, 0
        %930 = vmatprep.subr.mxu0 0.0
        %931 = vmatpush1.msra.mxu0 0.0
        %932 = vmatprep.subr.mxu0 0.0
        %933 = vmatpush1.msra.mxu0 0.0
        %934 = vmatprep.subr.mxu0 0.0
        %935 = vmatpush1.msra.mxu0 0.0
        %936 = vmatprep.subr.mxu0 0.0
        %937 = vmatpush1.msra.mxu0 0.0
        %938 = vmatprep.subr.mxu0 0.0
        %939 = vmatpush1.msra.mxu0 0.0
        %940 = vmatprep.subr.mxu0 0.0
        %941 = vmatpush1.msra.mxu0 0.0
        %942 = vmatprep.subr.mxu0 0.0
        %943 = vmatpush1.msra.mxu0 0.0
        %944 = vmatprep.subr.mxu0 0.0
        %945 = vmatpush1.msra.mxu0 0.0
        %946 = vmatprep.subr.mxu0 0.0
        %947 = vmatpush1.msra.mxu0 0.0
        %948 = vmatprep.subr.mxu0 0.0
        %949 = vmatpush1.msra.mxu0 0.0
        %950 = vmatprep.subr.mxu0 0.0
        %951 = vmatpush1.msra.mxu0 0.0
        %952 = vmatprep.subr.mxu0 0.0
        %953 = vmatpush1.msra.mxu0 0.0
        %954 = vmatprep.subr.mxu0 0.0
        %955 = vmatpush1.msra.mxu0 0.0
        %956 = vmatprep.subr.mxu0 0.0
        %957 = vmatpush1.msra.mxu0 0.0
        %958 = vmatprep.subr.mxu0 0.0
        %959 = vmatpush1.msra.mxu0 0.0
        %960 = vmatprep.subr.mxu0 0.0
        %961 = vmatpush1.msra.mxu0 %v925
        %962 = vmatprep.subr.mxu0 0.0
        %963 = vmatpush2.msra.mxu0 0.0
        %964 = vmatprep.subr.mxu0 0.0
        %965 = vmatpush2.msra.mxu0 0.0
        %966 = vmatprep.subr.mxu0 0.0
        %967 = vmatpush2.msra.mxu0 0.0
        %968 = vmatprep.subr.mxu0 0.0
        %969 = vmatpush2.msra.mxu0 0.0
        %970 = vmatprep.subr.mxu0 0.0
        %971 = vmatpush2.msra.mxu0 0.0
        %972 = vmatprep.subr.mxu0 0.0
        %973 = vmatpush2.msra.mxu0 0.0
        %974 = vmatprep.subr.mxu0 0.0
        %975 = vmatpush2.msra.mxu0 0.0
        %976 = vmatprep.subr.mxu0 0.0
        %977 = vmatpush2.msra.mxu0 0.0
        %978 = vmatprep.subr.mxu0 0.0
        %979 = vmatpush2.msra.mxu0 0.0
        %980 = vmatprep.subr.mxu0 0.0
        %981 = vmatpush2.msra.mxu0 0.0
        %982 = vmatprep.subr.mxu0 0.0
        %983 = vmatpush2.msra.mxu0 0.0
        %984 = vmatprep.subr.mxu0 0.0
        %985 = vmatpush2.msra.mxu0 0.0
        %986 = vmatprep.subr.mxu0 0.0
        %987 = vmatpush2.msra.mxu0 0.0
        %988 = vmatprep.subr.mxu0 0.0
        %989 = vmatpush2.msra.mxu0 0.0
        %990 = vmatprep.subr.mxu0 0.0
        %991 = vmatpush2.msra.mxu0 0.0
        %992 = vmatprep.subr.mxu0 0.0
        %993 = vmatpush2.msra.mxu0 0.0
        %994 = vmatprep.mubr.f32.mxu0 0.0
        %995 = vmatmul.mubr.f32.gmra.mxu0 %v928
        %v996 = vpop.f32.mrf.mxu0
        %v997 = vadd.f32 0.0, %v996
        %v998 = vpop.f32.mrf.mxu0
        %999 = vdwg.mxu0
        %1000 = vrot.lane.b32.xlu0 %v742, 64
        %v1001 = vpop.permute.xlu0 %1000
        %v1004 = vsel %vm748, %v923, 0
        %1006 = vmatprep.subr.mxu0 0.0
        %1007 = vmatpush1.msra.mxu0 0.0
        %1008 = vmatprep.subr.mxu0 0.0
        %1009 = vmatpush1.msra.mxu0 0.0
        %1010 = vmatprep.subr.mxu0 0.0
        %1011 = vmatpush1.msra.mxu0 0.0
        %1012 = vmatprep.subr.mxu0 0.0
        %1013 = vmatpush1.msra.mxu0 0.0
        %1014 = vmatprep.subr.mxu0 0.0
        %1015 = vmatpush1.msra.mxu0 0.0
        %1016 = vmatprep.subr.mxu0 0.0
        %1017 = vmatpush1.msra.mxu0 0.0
        %1018 = vmatprep.subr.mxu0 0.0
        %1019 = vmatpush1.msra.mxu0 0.0
        %1020 = vmatprep.subr.mxu0 0.0
        %1021 = vmatpush1.msra.mxu0 0.0
        %1022 = vmatprep.subr.mxu0 0.0
        %1023 = vmatpush1.msra.mxu0 0.0
        %1024 = vmatprep.subr.mxu0 0.0
        %1025 = vmatpush1.msra.mxu0 0.0
        %1026 = vmatprep.subr.mxu0 0.0
        %1027 = vmatpush1.msra.mxu0 0.0
        %1028 = vmatprep.subr.mxu0 0.0
        %1029 = vmatpush1.msra.mxu0 0.0
        %1030 = vmatprep.subr.mxu0 0.0
        %1031 = vmatpush1.msra.mxu0 0.0
        %1032 = vmatprep.subr.mxu0 0.0
        %1033 = vmatpush1.msra.mxu0 0.0
        %1034 = vmatprep.subr.mxu0 0.0
        %1035 = vmatpush1.msra.mxu0 0.0
        %1036 = vmatprep.subr.mxu0 0.0
        %1037 = vmatpush1.msra.mxu0 %v1001
        %1038 = vmatprep.subr.mxu0 0.0
        %1039 = vmatpush2.msra.mxu0 0.0
        %1040 = vmatprep.subr.mxu0 0.0
        %1041 = vmatpush2.msra.mxu0 0.0
        %1042 = vmatprep.subr.mxu0 0.0
        %1043 = vmatpush2.msra.mxu0 0.0
        %1044 = vmatprep.subr.mxu0 0.0
        %1045 = vmatpush2.msra.mxu0 0.0
        %1046 = vmatprep.subr.mxu0 0.0
        %1047 = vmatpush2.msra.mxu0 0.0
        %1048 = vmatprep.subr.mxu0 0.0
        %1049 = vmatpush2.msra.mxu0 0.0
        %1050 = vmatprep.subr.mxu0 0.0
        %1051 = vmatpush2.msra.mxu0 0.0
        %1052 = vmatprep.subr.mxu0 0.0
        %1053 = vmatpush2.msra.mxu0 0.0
        %1054 = vmatprep.subr.mxu0 0.0
        %1055 = vmatpush2.msra.mxu0 0.0
        %1056 = vmatprep.subr.mxu0 0.0
        %1057 = vmatpush2.msra.mxu0 0.0
        %1058 = vmatprep.subr.mxu0 0.0
        %1059 = vmatpush2.msra.mxu0 0.0
        %1060 = vmatprep.subr.mxu0 0.0
        %1061 = vmatpush2.msra.mxu0 0.0
        %1062 = vmatprep.subr.mxu0 0.0
        %1063 = vmatpush2.msra.mxu0 0.0
        %1064 = vmatprep.subr.mxu0 0.0
        %1065 = vmatpush2.msra.mxu0 0.0
        %1066 = vmatprep.subr.mxu0 0.0
        %1067 = vmatpush2.msra.mxu0 0.0
        %1068 = vmatprep.subr.mxu0 0.0
        %1069 = vmatpush2.msra.mxu0 0.0
        %1070 = vmatprep.mubr.f32.mxu0 0.0
        %1071 = vmatmul.mubr.f32.gmra.mxu0 %v1004
        %v1072 = vpop.f32.mrf.mxu0
        %v1073 = vadd.f32 0.0, %v1072
        %v1074 = vpop.f32.mrf.mxu0
        %1075 = vdwg.mxu0
        %1076 = vrot.lane.b32.xlu0 %v737, 120
        %v1077 = vpop.permute.xlu0 %1076
        %1078 = vrot.lane.b32.xlu0 %v737, 88
        %v1079 = vpop.permute.xlu0 %1078
        %v1080 = vsel %vm748, %v1077, 0
        %v1082 = vsel %vm748, %v1079, 0
        %1084 = vmatprep.subr.mxu0 0.0
        %1085 = vmatpush1.xpose.msra.mxu0 0.0
        %1086 = vmatprep.subr.mxu0 0.0
        %1087 = vmatpush1.xpose.msra.mxu0 0.0
        %1088 = vmatprep.subr.mxu0 0.0
        %1089 = vmatpush1.xpose.msra.mxu0 0.0
        %1090 = vmatprep.subr.mxu0 0.0
        %1091 = vmatpush1.xpose.msra.mxu0 0.0
        %1092 = vmatprep.subr.mxu0 0.0
        %1093 = vmatpush1.xpose.msra.mxu0 0.0
        %1094 = vmatprep.subr.mxu0 0.0
        %1095 = vmatpush1.xpose.msra.mxu0 0.0
        %1096 = vmatprep.subr.mxu0 0.0
        %1097 = vmatpush1.xpose.msra.mxu0 0.0
        %1098 = vmatprep.subr.mxu0 0.0
        %1099 = vmatpush1.xpose.msra.mxu0 0.0
        %1100 = vmatprep.subr.mxu0 0.0
        %1101 = vmatpush1.xpose.msra.mxu0 0.0
        %1102 = vmatprep.subr.mxu0 0.0
        %1103 = vmatpush1.xpose.msra.mxu0 0.0
        %1104 = vmatprep.subr.mxu0 0.0
        %1105 = vmatpush1.xpose.msra.mxu0 0.0
        %1106 = vmatprep.subr.mxu0 0.0
        %1107 = vmatpush1.xpose.msra.mxu0 0.0
        %1108 = vmatprep.subr.mxu0 0.0
        %1109 = vmatpush1.xpose.msra.mxu0 0.0
        %1110 = vmatprep.subr.mxu0 0.0
        %1111 = vmatpush1.xpose.msra.mxu0 0.0
        %1112 = vmatprep.subr.mxu0 0.0
        %1113 = vmatpush1.xpose.msra.mxu0 0.0
        %1114 = vmatprep.subr.mxu0 0.0
        %1115 = vmatpush1.xpose.msra.mxu0 %v1082
        %1116 = vmatprep.subr.mxu0 0.0
        %1117 = vmatpush2.xpose.msra.mxu0 0.0
        %1118 = vmatprep.subr.mxu0 0.0
        %1119 = vmatpush2.xpose.msra.mxu0 0.0
        %1120 = vmatprep.subr.mxu0 0.0
        %1121 = vmatpush2.xpose.msra.mxu0 0.0
        %1122 = vmatprep.subr.mxu0 0.0
        %1123 = vmatpush2.xpose.msra.mxu0 0.0
        %1124 = vmatprep.subr.mxu0 0.0
        %1125 = vmatpush2.xpose.msra.mxu0 0.0
        %1126 = vmatprep.subr.mxu0 0.0
        %1127 = vmatpush2.xpose.msra.mxu0 0.0
        %1128 = vmatprep.subr.mxu0 0.0
        %1129 = vmatpush2.xpose.msra.mxu0 0.0
        %1130 = vmatprep.subr.mxu0 0.0
        %1131 = vmatpush2.xpose.msra.mxu0 0.0
        %1132 = vmatprep.subr.mxu0 0.0
        %1133 = vmatpush2.xpose.msra.mxu0 0.0
        %1134 = vmatprep.subr.mxu0 0.0
        %1135 = vmatpush2.xpose.msra.mxu0 0.0
        %1136 = vmatprep.subr.mxu0 0.0
        %1137 = vmatpush2.xpose.msra.mxu0 0.0
        %1138 = vmatprep.subr.mxu0 0.0
        %1139 = vmatpush2.xpose.msra.mxu0 0.0
        %1140 = vmatprep.subr.mxu0 0.0
        %1141 = vmatpush2.xpose.msra.mxu0 0.0
        %1142 = vmatprep.subr.mxu0 0.0
        %1143 = vmatpush2.xpose.msra.mxu0 0.0
        %1144 = vmatprep.subr.mxu0 0.0
        %1145 = vmatpush2.xpose.msra.mxu0 0.0
        %1146 = vmatprep.subr.mxu0 0.0
        %1147 = vmatpush2.xpose.msra.mxu0 0.0
        %1148 = vmatprep.mubr.f32.mxu0 0.0
        %1149 = vmatmul.mubr.f32.gmra.mxu0 %v1080
        %v1150 = vpop.f32.mrf.mxu0
        %v1151 = vadd.f32 0.0, %v1150
        %v1152 = vpop.f32.mrf.mxu0
        %1153 = vdwg.mxu0
        %1154 = vrot.lane.b32.xlu0 %v742, 120
        %v1155 = vpop.permute.xlu0 %1154
        %1156 = vrot.lane.b32.xlu0 %v742, 88
        %v1157 = vpop.permute.xlu0 %1156
        %v1158 = vsel %vm748, %v1155, 0
        %v1160 = vsel %vm748, %v1157, 0
        %1162 = vmatprep.subr.mxu0 0.0
        %1163 = vmatpush1.xpose.msra.mxu0 0.0
        %1164 = vmatprep.subr.mxu0 0.0
        %1165 = vmatpush1.xpose.msra.mxu0 0.0
        %1166 = vmatprep.subr.mxu0 0.0
        %1167 = vmatpush1.xpose.msra.mxu0 0.0
        %1168 = vmatprep.subr.mxu0 0.0
        %1169 = vmatpush1.xpose.msra.mxu0 0.0
        %1170 = vmatprep.subr.mxu0 0.0
        %1171 = vmatpush1.xpose.msra.mxu0 0.0
        %1172 = vmatprep.subr.mxu0 0.0
        %1173 = vmatpush1.xpose.msra.mxu0 0.0
        %1174 = vmatprep.subr.mxu0 0.0
        %1175 = vmatpush1.xpose.msra.mxu0 0.0
        %1176 = vmatprep.subr.mxu0 0.0
        %1177 = vmatpush1.xpose.msra.mxu0 0.0
        %1178 = vmatprep.subr.mxu0 0.0
        %1179 = vmatpush1.xpose.msra.mxu0 0.0
        %1180 = vmatprep.subr.mxu0 0.0
        %1181 = vmatpush1.xpose.msra.mxu0 0.0
        %1182 = vmatprep.subr.mxu0 0.0
        %1183 = vmatpush1.xpose.msra.mxu0 0.0
        %1184 = vmatprep.subr.mxu0 0.0
        %1185 = vmatpush1.xpose.msra.mxu0 0.0
        %1186 = vmatprep.subr.mxu0 0.0
        %1187 = vmatpush1.xpose.msra.mxu0 0.0
        %1188 = vmatprep.subr.mxu0 0.0
        %1189 = vmatpush1.xpose.msra.mxu0 0.0
        %1190 = vmatprep.subr.mxu0 0.0
        %1191 = vmatpush1.xpose.msra.mxu0 0.0
        %1192 = vmatprep.subr.mxu0 0.0
        %1193 = vmatpush1.xpose.msra.mxu0 %v1160
        %1194 = vmatprep.subr.mxu0 0.0
        %1195 = vmatpush2.xpose.msra.mxu0 0.0
        %1196 = vmatprep.subr.mxu0 0.0
        %1197 = vmatpush2.xpose.msra.mxu0 0.0
        %1198 = vmatprep.subr.mxu0 0.0
        %1199 = vmatpush2.xpose.msra.mxu0 0.0
        %1200 = vmatprep.subr.mxu0 0.0
        %1201 = vmatpush2.xpose.msra.mxu0 0.0
        %1202 = vmatprep.subr.mxu0 0.0
        %1203 = vmatpush2.xpose.msra.mxu0 0.0
        %1204 = vmatprep.subr.mxu0 0.0
        %1205 = vmatpush2.xpose.msra.mxu0 0.0
        %1206 = vmatprep.subr.mxu0 0.0
        %1207 = vmatpush2.xpose.msra.mxu0 0.0
        %1208 = vmatprep.subr.mxu0 0.0
        %1209 = vmatpush2.xpose.msra.mxu0 0.0
        %1210 = vmatprep.subr.mxu0 0.0
        %1211 = vmatpush2.xpose.msra.mxu0 0.0
        %1212 = vmatprep.subr.mxu0 0.0
        %1213 = vmatpush2.xpose.msra.mxu0 0.0
        %1214 = vmatprep.subr.mxu0 0.0
        %1215 = vmatpush2.xpose.msra.mxu0 0.0
        %1216 = vmatprep.subr.mxu0 0.0
        %1217 = vmatpush2.xpose.msra.mxu0 0.0
        %1218 = vmatprep.subr.mxu0 0.0
        %1219 = vmatpush2.xpose.msra.mxu0 0.0
        %1220 = vmatprep.subr.mxu0 0.0
        %1221 = vmatpush2.xpose.msra.mxu0 0.0
        %1222 = vmatprep.subr.mxu0 0.0
        %1223 = vmatpush2.xpose.msra.mxu0 0.0
        %1224 = vmatprep.subr.mxu0 0.0
        %1225 = vmatpush2.xpose.msra.mxu0 0.0
        %1226 = vmatprep.mubr.f32.mxu0 0.0
        %1227 = vmatmul.mubr.f32.gmra.mxu0 %v1158
        %v1228 = vpop.f32.mrf.mxu0
        %v1229 = vadd.f32 0.0, %v1228
        %v1230 = vpop.f32.mrf.mxu0
        %1231 = vdwg.mxu0
        %v1232 = vsel %vm748, %v1151, -inf
        %1233 = vmax.xlane.f32.xlu0 %v1232
        %v1234 = vpop.xlane.xlu0 %1233
        %v1235 = vsel %vm748, %v1229, -inf
        %1236 = vmax.xlane.f32.xlu0 %v1235
        %v1237 = vpop.xlane.xlu0 %1236
        %v1238 = vsub.f32 %v1151, %v1234
        %v1239 = vsub.f32 %v1229, %v1237
        %v1240 = vmul.f32 %v1238, 1.442695
        %v1241 = vpow.pop %v1240
        %v1242 = vmul.f32 %v1239, 1.442695
        %v1243 = vpow.pop %v1242
        %v1244 = vsel %vm748, %v1241, 0.0
        %1245 = vadd.xlane.f32.xlu0 %v1244
        %v1246 = vpop.xlane.xlu0 %1245
        %v1247 = vsel %vm748, %v1243, 0.0
        %1248 = vadd.xlane.f32.xlu0 %v1247
        %v1249 = vpop.xlane.xlu0 %1248
        %v1250 = vrcp.pop %v1246
        %v1251 = vmul.f32 1.0, %v1250
        %v1252 = vrcp.pop %v1249
        %v1253 = vmul.f32 1.0, %v1252
        %v1254 = vmul.f32 %v1241, %v1251
        %v1255 = vmul.f32 %v1243, %v1253
        %1256 = vrot.lane.b32.xlu0 %v737, 56
        %v1257 = vpop.permute.xlu0 %1256
        %v1260 = vsel %vm748, %v1254, 0
        %1262 = vmatprep.subr.mxu0 0.0
        %1263 = vmatpush1.msra.mxu0 0.0
        %1264 = vmatprep.subr.mxu0 0.0
        %1265 = vmatpush1.msra.mxu0 0.0
        %1266 = vmatprep.subr.mxu0 0.0
        %1267 = vmatpush1.msra.mxu0 0.0
        %1268 = vmatprep.subr.mxu0 0.0
        %1269 = vmatpush1.msra.mxu0 0.0
        %1270 = vmatprep.subr.mxu0 0.0
        %1271 = vmatpush1.msra.mxu0 0.0
        %1272 = vmatprep.subr.mxu0 0.0
        %1273 = vmatpush1.msra.mxu0 0.0
        %1274 = vmatprep.subr.mxu0 0.0
        %1275 = vmatpush1.msra.mxu0 0.0
        %1276 = vmatprep.subr.mxu0 0.0
        %1277 = vmatpush1.msra.mxu0 0.0
        %1278 = vmatprep.subr.mxu0 0.0
        %1279 = vmatpush1.msra.mxu0 0.0
        %1280 = vmatprep.subr.mxu0 0.0
        %1281 = vmatpush1.msra.mxu0 0.0
        %1282 = vmatprep.subr.mxu0 0.0
        %1283 = vmatpush1.msra.mxu0 0.0
        %1284 = vmatprep.subr.mxu0 0.0
        %1285 = vmatpush1.msra.mxu0 0.0
        %1286 = vmatprep.subr.mxu0 0.0
        %1287 = vmatpush1.msra.mxu0 0.0
        %1288 = vmatprep.subr.mxu0 0.0
        %1289 = vmatpush1.msra.mxu0 0.0
        %1290 = vmatprep.subr.mxu0 0.0
        %1291 = vmatpush1.msra.mxu0 0.0
        %1292 = vmatprep.subr.mxu0 0.0
        %1293 = vmatpush1.msra.mxu0 %v1257
        %1294 = vmatprep.subr.mxu0 0.0
        %1295 = vmatpush2.msra.mxu0 0.0
        %1296 = vmatprep.subr.mxu0 0.0
        %1297 = vmatpush2.msra.mxu0 0.0
        %1298 = vmatprep.subr.mxu0 0.0
        %1299 = vmatpush2.msra.mxu0 0.0
        %1300 = vmatprep.subr.mxu0 0.0
        %1301 = vmatpush2.msra.mxu0 0.0
        %1302 = vmatprep.subr.mxu0 0.0
        %1303 = vmatpush2.msra.mxu0 0.0
        %1304 = vmatprep.subr.mxu0 0.0
        %1305 = vmatpush2.msra.mxu0 0.0
        %1306 = vmatprep.subr.mxu0 0.0
        %1307 = vmatpush2.msra.mxu0 0.0
        %1308 = vmatprep.subr.mxu0 0.0
        %1309 = vmatpush2.msra.mxu0 0.0
        %1310 = vmatprep.subr.mxu0 0.0
        %1311 = vmatpush2.msra.mxu0 0.0
        %1312 = vmatprep.subr.mxu0 0.0
        %1313 = vmatpush2.msra.mxu0 0.0
        %1314 = vmatprep.subr.mxu0 0.0
        %1315 = vmatpush2.msra.mxu0 0.0
        %1316 = vmatprep.subr.mxu0 0.0
        %1317 = vmatpush2.msra.mxu0 0.0
        %1318 = vmatprep.subr.mxu0 0.0
        %1319 = vmatpush2.msra.mxu0 0.0
        %1320 = vmatprep.subr.mxu0 0.0
        %1321 = vmatpush2.msra.mxu0 0.0
        %1322 = vmatprep.subr.mxu0 0.0
        %1323 = vmatpush2.msra.mxu0 0.0
        %1324 = vmatprep.subr.mxu0 0.0
        %1325 = vmatpush2.msra.mxu0 0.0
        %1326 = vmatprep.mubr.f32.mxu0 0.0
        %1327 = vmatmul.mubr.f32.gmra.mxu0 %v1260
        %v1328 = vpop.f32.mrf.mxu0
        %v1329 = vadd.f32 0.0, %v1328
        %v1330 = vpop.f32.mrf.mxu0
        %1331 = vdwg.mxu0
        %1332 = vrot.lane.b32.xlu0 %v742, 56
        %v1333 = vpop.permute.xlu0 %1332
        %v1336 = vsel %vm748, %v1255, 0
        %1338 = vmatprep.subr.mxu0 0.0
        %1339 = vmatpush1.msra.mxu0 0.0
        %1340 = vmatprep.subr.mxu0 0.0
        %1341 = vmatpush1.msra.mxu0 0.0
        %1342 = vmatprep.subr.mxu0 0.0
        %1343 = vmatpush1.msra.mxu0 0.0
        %1344 = vmatprep.subr.mxu0 0.0
        %1345 = vmatpush1.msra.mxu0 0.0
        %1346 = vmatprep.subr.mxu0 0.0
        %1347 = vmatpush1.msra.mxu0 0.0
        %1348 = vmatprep.subr.mxu0 0.0
        %1349 = vmatpush1.msra.mxu0 0.0
        %1350 = vmatprep.subr.mxu0 0.0
        %1351 = vmatpush1.msra.mxu0 0.0
        %1352 = vmatprep.subr.mxu0 0.0
        %1353 = vmatpush1.msra.mxu0 0.0
        %1354 = vmatprep.subr.mxu0 0.0
        %1355 = vmatpush1.msra.mxu0 0.0
        %1356 = vmatprep.subr.mxu0 0.0
        %1357 = vmatpush1.msra.mxu0 0.0
        %1358 = vmatprep.subr.mxu0 0.0
        %1359 = vmatpush1.msra.mxu0 0.0
        %1360 = vmatprep.subr.mxu0 0.0
        %1361 = vmatpush1.msra.mxu0 0.0
        %1362 = vmatprep.subr.mxu0 0.0
        %1363 = vmatpush1.msra.mxu0 0.0
        %1364 = vmatprep.subr.mxu0 0.0
        %1365 = vmatpush1.msra.mxu0 0.0
        %1366 = vmatprep.subr.mxu0 0.0
        %1367 = vmatpush1.msra.mxu0 0.0
        %1368 = vmatprep.subr.mxu0 0.0
        %1369 = vmatpush1.msra.mxu0 %v1333
        %1370 = vmatprep.subr.mxu0 0.0
        %1371 = vmatpush2.msra.mxu0 0.0
        %1372 = vmatprep.subr.mxu0 0.0
        %1373 = vmatpush2.msra.mxu0 0.0
        %1374 = vmatprep.subr.mxu0 0.0
        %1375 = vmatpush2.msra.mxu0 0.0
        %1376 = vmatprep.subr.mxu0 0.0
        %1377 = vmatpush2.msra.mxu0 0.0
        %1378 = vmatprep.subr.mxu0 0.0
        %1379 = vmatpush2.msra.mxu0 0.0
        %1380 = vmatprep.subr.mxu0 0.0
        %1381 = vmatpush2.msra.mxu0 0.0
        %1382 = vmatprep.subr.mxu0 0.0
        %1383 = vmatpush2.msra.mxu0 0.0
        %1384 = vmatprep.subr.mxu0 0.0
        %1385 = vmatpush2.msra.mxu0 0.0
        %1386 = vmatprep.subr.mxu0 0.0
        %1387 = vmatpush2.msra.mxu0 0.0
        %1388 = vmatprep.subr.mxu0 0.0
        %1389 = vmatpush2.msra.mxu0 0.0
        %1390 = vmatprep.subr.mxu0 0.0
        %1391 = vmatpush2.msra.mxu0 0.0
        %1392 = vmatprep.subr.mxu0 0.0
        %1393 = vmatpush2.msra.mxu0 0.0
        %1394 = vmatprep.subr.mxu0 0.0
        %1395 = vmatpush2.msra.mxu0 0.0
        %1396 = vmatprep.subr.mxu0 0.0
        %1397 = vmatpush2.msra.mxu0 0.0
        %1398 = vmatprep.subr.mxu0 0.0
        %1399 = vmatpush2.msra.mxu0 0.0
        %1400 = vmatprep.subr.mxu0 0.0
        %1401 = vmatpush2.msra.mxu0 0.0
        %1402 = vmatprep.mubr.f32.mxu0 0.0
        %1403 = vmatmul.mubr.f32.gmra.mxu0 %v1336
        %v1404 = vpop.f32.mrf.mxu0
        %v1405 = vadd.f32 0.0, %v1404
        %v1406 = vpop.f32.mrf.mxu0
        %1407 = vdwg.mxu0
        %1408 = vrot.lane.b32.xlu0 %v737, 112
        %v1409 = vpop.permute.xlu0 %1408
        %1410 = vrot.lane.b32.xlu0 %v737, 80
        %v1411 = vpop.permute.xlu0 %1410
        %v1412 = vsel %vm748, %v1409, 0
        %v1414 = vsel %vm748, %v1411, 0
        %1416 = vmatprep.subr.mxu0 0.0
        %1417 = vmatpush1.xpose.msra.mxu0 0.0
        %1418 = vmatprep.subr.mxu0 0.0
        %1419 = vmatpush1.xpose.msra.mxu0 0.0
        %1420 = vmatprep.subr.mxu0 0.0
        %1421 = vmatpush1.xpose.msra.mxu0 0.0
        %1422 = vmatprep.subr.mxu0 0.0
        %1423 = vmatpush1.xpose.msra.mxu0 0.0
        %1424 = vmatprep.subr.mxu0 0.0
        %1425 = vmatpush1.xpose.msra.mxu0 0.0
        %1426 = vmatprep.subr.mxu0 0.0
        %1427 = vmatpush1.xpose.msra.mxu0 0.0
        %1428 = vmatprep.subr.mxu0 0.0
        %1429 = vmatpush1.xpose.msra.mxu0 0.0
        %1430 = vmatprep.subr.mxu0 0.0
        %1431 = vmatpush1.xpose.msra.mxu0 0.0
        %1432 = vmatprep.subr.mxu0 0.0
        %1433 = vmatpush1.xpose.msra.mxu0 0.0
        %1434 = vmatprep.subr.mxu0 0.0
        %1435 = vmatpush1.xpose.msra.mxu0 0.0
        %1436 = vmatprep.subr.mxu0 0.0
        %1437 = vmatpush1.xpose.msra.mxu0 0.0
        %1438 = vmatprep.subr.mxu0 0.0
        %1439 = vmatpush1.xpose.msra.mxu0 0.0
        %1440 = vmatprep.subr.mxu0 0.0
        %1441 = vmatpush1.xpose.msra.mxu0 0.0
        %1442 = vmatprep.subr.mxu0 0.0
        %1443 = vmatpush1.xpose.msra.mxu0 0.0
        %1444 = vmatprep.subr.mxu0 0.0
        %1445 = vmatpush1.xpose.msra.mxu0 0.0
        %1446 = vmatprep.subr.mxu0 0.0
        %1447 = vmatpush1.xpose.msra.mxu0 %v1414
        %1448 = vmatprep.subr.mxu0 0.0
        %1449 = vmatpush2.xpose.msra.mxu0 0.0
        %1450 = vmatprep.subr.mxu0 0.0
        %1451 = vmatpush2.xpose.msra.mxu0 0.0
        %1452 = vmatprep.subr.mxu0 0.0
        %1453 = vmatpush2.xpose.msra.mxu0 0.0
        %1454 = vmatprep.subr.mxu0 0.0
        %1455 = vmatpush2.xpose.msra.mxu0 0.0
        %1456 = vmatprep.subr.mxu0 0.0
        %1457 = vmatpush2.xpose.msra.mxu0 0.0
        %1458 = vmatprep.subr.mxu0 0.0
        %1459 = vmatpush2.xpose.msra.mxu0 0.0
        %1460 = vmatprep.subr.mxu0 0.0
        %1461 = vmatpush2.xpose.msra.mxu0 0.0
        %1462 = vmatprep.subr.mxu0 0.0
        %1463 = vmatpush2.xpose.msra.mxu0 0.0
        %1464 = vmatprep.subr.mxu0 0.0
        %1465 = vmatpush2.xpose.msra.mxu0 0.0
        %1466 = vmatprep.subr.mxu0 0.0
        %1467 = vmatpush2.xpose.msra.mxu0 0.0
        %1468 = vmatprep.subr.mxu0 0.0
        %1469 = vmatpush2.xpose.msra.mxu0 0.0
        %1470 = vmatprep.subr.mxu0 0.0
        %1471 = vmatpush2.xpose.msra.mxu0 0.0
        %1472 = vmatprep.subr.mxu0 0.0
        %1473 = vmatpush2.xpose.msra.mxu0 0.0
        %1474 = vmatprep.subr.mxu0 0.0
        %1475 = vmatpush2.xpose.msra.mxu0 0.0
        %1476 = vmatprep.subr.mxu0 0.0
        %1477 = vmatpush2.xpose.msra.mxu0 0.0
        %1478 = vmatprep.subr.mxu0 0.0
        %1479 = vmatpush2.xpose.msra.mxu0 0.0
        %1480 = vmatprep.mubr.f32.mxu0 0.0
        %1481 = vmatmul.mubr.f32.gmra.mxu0 %v1412
        %v1482 = vpop.f32.mrf.mxu0
        %v1483 = vadd.f32 0.0, %v1482
        %v1484 = vpop.f32.mrf.mxu0
        %1485 = vdwg.mxu0
        %1486 = vrot.lane.b32.xlu0 %v742, 112
        %v1487 = vpop.permute.xlu0 %1486
        %1488 = vrot.lane.b32.xlu0 %v742, 80
        %v1489 = vpop.permute.xlu0 %1488
        %v1490 = vsel %vm748, %v1487, 0
        %v1492 = vsel %vm748, %v1489, 0
        %1494 = vmatprep.subr.mxu0 0.0
        %1495 = vmatpush1.xpose.msra.mxu0 0.0
        %1496 = vmatprep.subr.mxu0 0.0
        %1497 = vmatpush1.xpose.msra.mxu0 0.0
        %1498 = vmatprep.subr.mxu0 0.0
        %1499 = vmatpush1.xpose.msra.mxu0 0.0
        %1500 = vmatprep.subr.mxu0 0.0
        %1501 = vmatpush1.xpose.msra.mxu0 0.0
        %1502 = vmatprep.subr.mxu0 0.0
        %1503 = vmatpush1.xpose.msra.mxu0 0.0
        %1504 = vmatprep.subr.mxu0 0.0
        %1505 = vmatpush1.xpose.msra.mxu0 0.0
        %1506 = vmatprep.subr.mxu0 0.0
        %1507 = vmatpush1.xpose.msra.mxu0 0.0
        %1508 = vmatprep.subr.mxu0 0.0
        %1509 = vmatpush1.xpose.msra.mxu0 0.0
        %1510 = vmatprep.subr.mxu0 0.0
        %1511 = vmatpush1.xpose.msra.mxu0 0.0
        %1512 = vmatprep.subr.mxu0 0.0
        %1513 = vmatpush1.xpose.msra.mxu0 0.0
        %1514 = vmatprep.subr.mxu0 0.0
        %1515 = vmatpush1.xpose.msra.mxu0 0.0
        %1516 = vmatprep.subr.mxu0 0.0
        %1517 = vmatpush1.xpose.msra.mxu0 0.0
        %1518 = vmatprep.subr.mxu0 0.0
        %1519 = vmatpush1.xpose.msra.mxu0 0.0
        %1520 = vmatprep.subr.mxu0 0.0
        %1521 = vmatpush1.xpose.msra.mxu0 0.0
        %1522 = vmatprep.subr.mxu0 0.0
        %1523 = vmatpush1.xpose.msra.mxu0 0.0
        %1524 = vmatprep.subr.mxu0 0.0
        %1525 = vmatpush1.xpose.msra.mxu0 %v1492
        %1526 = vmatprep.subr.mxu0 0.0
        %1527 = vmatpush2.xpose.msra.mxu0 0.0
        %1528 = vmatprep.subr.mxu0 0.0
        %1529 = vmatpush2.xpose.msra.mxu0 0.0
        %1530 = vmatprep.subr.mxu0 0.0
        %1531 = vmatpush2.xpose.msra.mxu0 0.0
        %1532 = vmatprep.subr.mxu0 0.0
        %1533 = vmatpush2.xpose.msra.mxu0 0.0
        %1534 = vmatprep.subr.mxu0 0.0
        %1535 = vmatpush2.xpose.msra.mxu0 0.0
        %1536 = vmatprep.subr.mxu0 0.0
        %1537 = vmatpush2.xpose.msra.mxu0 0.0
        %1538 = vmatprep.subr.mxu0 0.0
        %1539 = vmatpush2.xpose.msra.mxu0 0.0
        %1540 = vmatprep.subr.mxu0 0.0
        %1541 = vmatpush2.xpose.msra.mxu0 0.0
        %1542 = vmatprep.subr.mxu0 0.0
        %1543 = vmatpush2.xpose.msra.mxu0 0.0
        %1544 = vmatprep.subr.mxu0 0.0
        %1545 = vmatpush2.xpose.msra.mxu0 0.0
        %1546 = vmatprep.subr.mxu0 0.0
        %1547 = vmatpush2.xpose.msra.mxu0 0.0
        %1548 = vmatprep.subr.mxu0 0.0
        %1549 = vmatpush2.xpose.msra.mxu0 0.0
        %1550 = vmatprep.subr.mxu0 0.0
        %1551 = vmatpush2.xpose.msra.mxu0 0.0
        %1552 = vmatprep.subr.mxu0 0.0
        %1553 = vmatpush2.xpose.msra.mxu0 0.0
        %1554 = vmatprep.subr.mxu0 0.0
        %1555 = vmatpush2.xpose.msra.mxu0 0.0
        %1556 = vmatprep.subr.mxu0 0.0
        %1557 = vmatpush2.xpose.msra.mxu0 0.0
        %1558 = vmatprep.mubr.f32.mxu0 0.0
        %1559 = vmatmul.mubr.f32.gmra.mxu0 %v1490
        %v1560 = vpop.f32.mrf.mxu0
        %v1561 = vadd.f32 0.0, %v1560
        %v1562 = vpop.f32.mrf.mxu0
        %1563 = vdwg.mxu0
        %v1564 = vsel %vm748, %v1483, -inf
        %1565 = vmax.xlane.f32.xlu0 %v1564
        %v1566 = vpop.xlane.xlu0 %1565
        %v1567 = vsel %vm748, %v1561, -inf
        %1568 = vmax.xlane.f32.xlu0 %v1567
        %v1569 = vpop.xlane.xlu0 %1568
        %v1570 = vsub.f32 %v1483, %v1566
        %v1571 = vsub.f32 %v1561, %v1569
        %v1572 = vmul.f32 %v1570, 1.442695
        %v1573 = vpow.pop %v1572
        %v1574 = vmul.f32 %v1571, 1.442695
        %v1575 = vpow.pop %v1574
        %v1576 = vsel %vm748, %v1573, 0.0
        %1577 = vadd.xlane.f32.xlu0 %v1576
        %v1578 = vpop.xlane.xlu0 %1577
        %v1579 = vsel %vm748, %v1575, 0.0
        %1580 = vadd.xlane.f32.xlu0 %v1579
        %v1581 = vpop.xlane.xlu0 %1580
        %v1582 = vrcp.pop %v1578
        %v1583 = vmul.f32 1.0, %v1582
        %v1584 = vrcp.pop %v1581
        %v1585 = vmul.f32 1.0, %v1584
        %v1586 = vmul.f32 %v1573, %v1583
        %v1587 = vmul.f32 %v1575, %v1585
        %1588 = vrot.lane.b32.xlu0 %v737, 48
        %v1589 = vpop.permute.xlu0 %1588
        %v1592 = vsel %vm748, %v1586, 0
        %1594 = vmatprep.subr.mxu0 0.0
        %1595 = vmatpush1.msra.mxu0 0.0
        %1596 = vmatprep.subr.mxu0 0.0
        %1597 = vmatpush1.msra.mxu0 0.0
        %1598 = vmatprep.subr.mxu0 0.0
        %1599 = vmatpush1.msra.mxu0 0.0
        %1600 = vmatprep.subr.mxu0 0.0
        %1601 = vmatpush1.msra.mxu0 0.0
        %1602 = vmatprep.subr.mxu0 0.0
        %1603 = vmatpush1.msra.mxu0 0.0
        %1604 = vmatprep.subr.mxu0 0.0
        %1605 = vmatpush1.msra.mxu0 0.0
        %1606 = vmatprep.subr.mxu0 0.0
        %1607 = vmatpush1.msra.mxu0 0.0
        %1608 = vmatprep.subr.mxu0 0.0
        %1609 = vmatpush1.msra.mxu0 0.0
        %1610 = vmatprep.subr.mxu0 0.0
        %1611 = vmatpush1.msra.mxu0 0.0
        %1612 = vmatprep.subr.mxu0 0.0
        %1613 = vmatpush1.msra.mxu0 0.0
        %1614 = vmatprep.subr.mxu0 0.0
        %1615 = vmatpush1.msra.mxu0 0.0
        %1616 = vmatprep.subr.mxu0 0.0
        %1617 = vmatpush1.msra.mxu0 0.0
        %1618 = vmatprep.subr.mxu0 0.0
        %1619 = vmatpush1.msra.mxu0 0.0
        %1620 = vmatprep.subr.mxu0 0.0
        %1621 = vmatpush1.msra.mxu0 0.0
        %1622 = vmatprep.subr.mxu0 0.0
        %1623 = vmatpush1.msra.mxu0 0.0
        %1624 = vmatprep.subr.mxu0 0.0
        %1625 = vmatpush1.msra.mxu0 %v1589
        %1626 = vmatprep.subr.mxu0 0.0
        %1627 = vmatpush2.msra.mxu0 0.0
        %1628 = vmatprep.subr.mxu0 0.0
        %1629 = vmatpush2.msra.mxu0 0.0
        %1630 = vmatprep.subr.mxu0 0.0
        %1631 = vmatpush2.msra.mxu0 0.0
        %1632 = vmatprep.subr.mxu0 0.0
        %1633 = vmatpush2.msra.mxu0 0.0
        %1634 = vmatprep.subr.mxu0 0.0
        %1635 = vmatpush2.msra.mxu0 0.0
        %1636 = vmatprep.subr.mxu0 0.0
        %1637 = vmatpush2.msra.mxu0 0.0
        %1638 = vmatprep.subr.mxu0 0.0
        %1639 = vmatpush2.msra.mxu0 0.0
        %1640 = vmatprep.subr.mxu0 0.0
        %1641 = vmatpush2.msra.mxu0 0.0
        %1642 = vmatprep.subr.mxu0 0.0
        %1643 = vmatpush2.msra.mxu0 0.0
        %1644 = vmatprep.subr.mxu0 0.0
        %1645 = vmatpush2.msra.mxu0 0.0
        %1646 = vmatprep.subr.mxu0 0.0
        %1647 = vmatpush2.msra.mxu0 0.0
        %1648 = vmatprep.subr.mxu0 0.0
        %1649 = vmatpush2.msra.mxu0 0.0
        %1650 = vmatprep.subr.mxu0 0.0
        %1651 = vmatpush2.msra.mxu0 0.0
        %1652 = vmatprep.subr.mxu0 0.0
        %1653 = vmatpush2.msra.mxu0 0.0
        %1654 = vmatprep.subr.mxu0 0.0
        %1655 = vmatpush2.msra.mxu0 0.0
        %1656 = vmatprep.subr.mxu0 0.0
        %1657 = vmatpush2.msra.mxu0 0.0
        %1658 = vmatprep.mubr.f32.mxu0 0.0
        %1659 = vmatmul.mubr.f32.gmra.mxu0 %v1592
        %v1660 = vpop.f32.mrf.mxu0
        %v1661 = vadd.f32 0.0, %v1660
        %v1662 = vpop.f32.mrf.mxu0
        %1663 = vdwg.mxu0
        %1664 = vrot.lane.b32.xlu0 %v742, 48
        %v1665 = vpop.permute.xlu0 %1664
        %v1668 = vsel %vm748, %v1587, 0
        %1670 = vmatprep.subr.mxu0 0.0
        %1671 = vmatpush1.msra.mxu0 0.0
        %1672 = vmatprep.subr.mxu0 0.0
        %1673 = vmatpush1.msra.mxu0 0.0
        %1674 = vmatprep.subr.mxu0 0.0
        %1675 = vmatpush1.msra.mxu0 0.0
        %1676 = vmatprep.subr.mxu0 0.0
        %1677 = vmatpush1.msra.mxu0 0.0
        %1678 = vmatprep.subr.mxu0 0.0
        %1679 = vmatpush1.msra.mxu0 0.0
        %1680 = vmatprep.subr.mxu0 0.0
        %1681 = vmatpush1.msra.mxu0 0.0
        %1682 = vmatprep.subr.mxu0 0.0
        %1683 = vmatpush1.msra.mxu0 0.0
        %1684 = vmatprep.subr.mxu0 0.0
        %1685 = vmatpush1.msra.mxu0 0.0
        %1686 = vmatprep.subr.mxu0 0.0
        %1687 = vmatpush1.msra.mxu0 0.0
        %1688 = vmatprep.subr.mxu0 0.0
        %1689 = vmatpush1.msra.mxu0 0.0
        %1690 = vmatprep.subr.mxu0 0.0
        %1691 = vmatpush1.msra.mxu0 0.0
        %1692 = vmatprep.subr.mxu0 0.0
        %1693 = vmatpush1.msra.mxu0 0.0
        %1694 = vmatprep.subr.mxu0 0.0
        %1695 = vmatpush1.msra.mxu0 0.0
        %1696 = vmatprep.subr.mxu0 0.0
        %1697 = vmatpush1.msra.mxu0 0.0
        %1698 = vmatprep.subr.mxu0 0.0
        %1699 = vmatpush1.msra.mxu0 0.0
        %1700 = vmatprep.subr.mxu0 0.0
        %1701 = vmatpush1.msra.mxu0 %v1665
        %1702 = vmatprep.subr.mxu0 0.0
        %1703 = vmatpush2.msra.mxu0 0.0
        %1704 = vmatprep.subr.mxu0 0.0
        %1705 = vmatpush2.msra.mxu0 0.0
        %1706 = vmatprep.subr.mxu0 0.0
        %1707 = vmatpush2.msra.mxu0 0.0
        %1708 = vmatprep.subr.mxu0 0.0
        %1709 = vmatpush2.msra.mxu0 0.0
        %1710 = vmatprep.subr.mxu0 0.0
        %1711 = vmatpush2.msra.mxu0 0.0
        %1712 = vmatprep.subr.mxu0 0.0
        %1713 = vmatpush2.msra.mxu0 0.0
        %1714 = vmatprep.subr.mxu0 0.0
        %1715 = vmatpush2.msra.mxu0 0.0
        %1716 = vmatprep.subr.mxu0 0.0
        %1717 = vmatpush2.msra.mxu0 0.0
        %1718 = vmatprep.subr.mxu0 0.0
        %1719 = vmatpush2.msra.mxu0 0.0
        %1720 = vmatprep.subr.mxu0 0.0
        %1721 = vmatpush2.msra.mxu0 0.0
        %1722 = vmatprep.subr.mxu0 0.0
        %1723 = vmatpush2.msra.mxu0 0.0
        %1724 = vmatprep.subr.mxu0 0.0
        %1725 = vmatpush2.msra.mxu0 0.0
        %1726 = vmatprep.subr.mxu0 0.0
        %1727 = vmatpush2.msra.mxu0 0.0
        %1728 = vmatprep.subr.mxu0 0.0
        %1729 = vmatpush2.msra.mxu0 0.0
        %1730 = vmatprep.subr.mxu0 0.0
        %1731 = vmatpush2.msra.mxu0 0.0
        %1732 = vmatprep.subr.mxu0 0.0
        %1733 = vmatpush2.msra.mxu0 0.0
        %1734 = vmatprep.mubr.f32.mxu0 0.0
        %1735 = vmatmul.mubr.f32.gmra.mxu0 %v1668
        %v1736 = vpop.f32.mrf.mxu0
        %v1737 = vadd.f32 0.0, %v1736
        %v1738 = vpop.f32.mrf.mxu0
        %1739 = vdwg.mxu0
        %1740 = vrot.lane.b32.xlu0 %v737, 104
        %v1741 = vpop.permute.xlu0 %1740
        %1742 = vrot.lane.b32.xlu0 %v737, 72
        %v1743 = vpop.permute.xlu0 %1742
        %v1744 = vsel %vm748, %v1741, 0
        %v1746 = vsel %vm748, %v1743, 0
        %1748 = vmatprep.subr.mxu0 0.0
        %1749 = vmatpush1.xpose.msra.mxu0 0.0
        %1750 = vmatprep.subr.mxu0 0.0
        %1751 = vmatpush1.xpose.msra.mxu0 0.0
        %1752 = vmatprep.subr.mxu0 0.0
        %1753 = vmatpush1.xpose.msra.mxu0 0.0
        %1754 = vmatprep.subr.mxu0 0.0
        %1755 = vmatpush1.xpose.msra.mxu0 0.0
        %1756 = vmatprep.subr.mxu0 0.0
        %1757 = vmatpush1.xpose.msra.mxu0 0.0
        %1758 = vmatprep.subr.mxu0 0.0
        %1759 = vmatpush1.xpose.msra.mxu0 0.0
        %1760 = vmatprep.subr.mxu0 0.0
        %1761 = vmatpush1.xpose.msra.mxu0 0.0
        %1762 = vmatprep.subr.mxu0 0.0
        %1763 = vmatpush1.xpose.msra.mxu0 0.0
        %1764 = vmatprep.subr.mxu0 0.0
        %1765 = vmatpush1.xpose.msra.mxu0 0.0
        %1766 = vmatprep.subr.mxu0 0.0
        %1767 = vmatpush1.xpose.msra.mxu0 0.0
        %1768 = vmatprep.subr.mxu0 0.0
        %1769 = vmatpush1.xpose.msra.mxu0 0.0
        %1770 = vmatprep.subr.mxu0 0.0
        %1771 = vmatpush1.xpose.msra.mxu0 0.0
        %1772 = vmatprep.subr.mxu0 0.0
        %1773 = vmatpush1.xpose.msra.mxu0 0.0
        %1774 = vmatprep.subr.mxu0 0.0
        %1775 = vmatpush1.xpose.msra.mxu0 0.0
        %1776 = vmatprep.subr.mxu0 0.0
        %1777 = vmatpush1.xpose.msra.mxu0 0.0
        %1778 = vmatprep.subr.mxu0 0.0
        %1779 = vmatpush1.xpose.msra.mxu0 %v1746
        %1780 = vmatprep.subr.mxu0 0.0
        %1781 = vmatpush2.xpose.msra.mxu0 0.0
        %1782 = vmatprep.subr.mxu0 0.0
        %1783 = vmatpush2.xpose.msra.mxu0 0.0
        %1784 = vmatprep.subr.mxu0 0.0
        %1785 = vmatpush2.xpose.msra.mxu0 0.0
        %1786 = vmatprep.subr.mxu0 0.0
        %1787 = vmatpush2.xpose.msra.mxu0 0.0
        %1788 = vmatprep.subr.mxu0 0.0
        %1789 = vmatpush2.xpose.msra.mxu0 0.0
        %1790 = vmatprep.subr.mxu0 0.0
        %1791 = vmatpush2.xpose.msra.mxu0 0.0
        %1792 = vmatprep.subr.mxu0 0.0
        %1793 = vmatpush2.xpose.msra.mxu0 0.0
        %1794 = vmatprep.subr.mxu0 0.0
        %1795 = vmatpush2.xpose.msra.mxu0 0.0
        %1796 = vmatprep.subr.mxu0 0.0
        %1797 = vmatpush2.xpose.msra.mxu0 0.0
        %1798 = vmatprep.subr.mxu0 0.0
        %1799 = vmatpush2.xpose.msra.mxu0 0.0
        %1800 = vmatprep.subr.mxu0 0.0
        %1801 = vmatpush2.xpose.msra.mxu0 0.0
        %1802 = vmatprep.subr.mxu0 0.0
        %1803 = vmatpush2.xpose.msra.mxu0 0.0
        %1804 = vmatprep.subr.mxu0 0.0
        %1805 = vmatpush2.xpose.msra.mxu0 0.0
        %1806 = vmatprep.subr.mxu0 0.0
        %1807 = vmatpush2.xpose.msra.mxu0 0.0
        %1808 = vmatprep.subr.mxu0 0.0
        %1809 = vmatpush2.xpose.msra.mxu0 0.0
        %1810 = vmatprep.subr.mxu0 0.0
        %1811 = vmatpush2.xpose.msra.mxu0 0.0
        %1812 = vmatprep.mubr.f32.mxu0 0.0
        %1813 = vmatmul.mubr.f32.gmra.mxu0 %v1744
        %v1814 = vpop.f32.mrf.mxu0
        %v1815 = vadd.f32 0.0, %v1814
        %v1816 = vpop.f32.mrf.mxu0
        %1817 = vdwg.mxu0
        %1818 = vrot.lane.b32.xlu0 %v742, 104
        %v1819 = vpop.permute.xlu0 %1818
        %1820 = vrot.lane.b32.xlu0 %v742, 72
        %v1821 = vpop.permute.xlu0 %1820
        %v1822 = vsel %vm748, %v1819, 0
        %v1824 = vsel %vm748, %v1821, 0
        %1826 = vmatprep.subr.mxu0 0.0
        %1827 = vmatpush1.xpose.msra.mxu0 0.0
        %1828 = vmatprep.subr.mxu0 0.0
        %1829 = vmatpush1.xpose.msra.mxu0 0.0
        %1830 = vmatprep.subr.mxu0 0.0
        %1831 = vmatpush1.xpose.msra.mxu0 0.0
        %1832 = vmatprep.subr.mxu0 0.0
        %1833 = vmatpush1.xpose.msra.mxu0 0.0
        %1834 = vmatprep.subr.mxu0 0.0
        %1835 = vmatpush1.xpose.msra.mxu0 0.0
        %1836 = vmatprep.subr.mxu0 0.0
        %1837 = vmatpush1.xpose.msra.mxu0 0.0
        %1838 = vmatprep.subr.mxu0 0.0
        %1839 = vmatpush1.xpose.msra.mxu0 0.0
        %1840 = vmatprep.subr.mxu0 0.0
        %1841 = vmatpush1.xpose.msra.mxu0 0.0
        %1842 = vmatprep.subr.mxu0 0.0
        %1843 = vmatpush1.xpose.msra.mxu0 0.0
        %1844 = vmatprep.subr.mxu0 0.0
        %1845 = vmatpush1.xpose.msra.mxu0 0.0
        %1846 = vmatprep.subr.mxu0 0.0
        %1847 = vmatpush1.xpose.msra.mxu0 0.0
        %1848 = vmatprep.subr.mxu0 0.0
        %1849 = vmatpush1.xpose.msra.mxu0 0.0
        %1850 = vmatprep.subr.mxu0 0.0
        %1851 = vmatpush1.xpose.msra.mxu0 0.0
        %1852 = vmatprep.subr.mxu0 0.0
        %1853 = vmatpush1.xpose.msra.mxu0 0.0
        %1854 = vmatprep.subr.mxu0 0.0
        %1855 = vmatpush1.xpose.msra.mxu0 0.0
        %1856 = vmatprep.subr.mxu0 0.0
        %1857 = vmatpush1.xpose.msra.mxu0 %v1824
        %1858 = vmatprep.subr.mxu0 0.0
        %1859 = vmatpush2.xpose.msra.mxu0 0.0
        %1860 = vmatprep.subr.mxu0 0.0
        %1861 = vmatpush2.xpose.msra.mxu0 0.0
        %1862 = vmatprep.subr.mxu0 0.0
        %1863 = vmatpush2.xpose.msra.mxu0 0.0
        %1864 = vmatprep.subr.mxu0 0.0
        %1865 = vmatpush2.xpose.msra.mxu0 0.0
        %1866 = vmatprep.subr.mxu0 0.0
        %1867 = vmatpush2.xpose.msra.mxu0 0.0
        %1868 = vmatprep.subr.mxu0 0.0
        %1869 = vmatpush2.xpose.msra.mxu0 0.0
        %1870 = vmatprep.subr.mxu0 0.0
        %1871 = vmatpush2.xpose.msra.mxu0 0.0
        %1872 = vmatprep.subr.mxu0 0.0
        %1873 = vmatpush2.xpose.msra.mxu0 0.0
        %1874 = vmatprep.subr.mxu0 0.0
        %1875 = vmatpush2.xpose.msra.mxu0 0.0
        %1876 = vmatprep.subr.mxu0 0.0
        %1877 = vmatpush2.xpose.msra.mxu0 0.0
        %1878 = vmatprep.subr.mxu0 0.0
        %1879 = vmatpush2.xpose.msra.mxu0 0.0
        %1880 = vmatprep.subr.mxu0 0.0
        %1881 = vmatpush2.xpose.msra.mxu0 0.0
        %1882 = vmatprep.subr.mxu0 0.0
        %1883 = vmatpush2.xpose.msra.mxu0 0.0
        %1884 = vmatprep.subr.mxu0 0.0
        %1885 = vmatpush2.xpose.msra.mxu0 0.0
        %1886 = vmatprep.subr.mxu0 0.0
        %1887 = vmatpush2.xpose.msra.mxu0 0.0
        %1888 = vmatprep.subr.mxu0 0.0
        %1889 = vmatpush2.xpose.msra.mxu0 0.0
        %1890 = vmatprep.mubr.f32.mxu0 0.0
        %1891 = vmatmul.mubr.f32.gmra.mxu0 %v1822
        %v1892 = vpop.f32.mrf.mxu0
        %v1893 = vadd.f32 0.0, %v1892
        %v1894 = vpop.f32.mrf.mxu0
        %1895 = vdwg.mxu0
        %v1896 = vsel %vm748, %v1815, -inf
        %1897 = vmax.xlane.f32.xlu0 %v1896
        %v1898 = vpop.xlane.xlu0 %1897
        %v1899 = vsel %vm748, %v1893, -inf
        %1900 = vmax.xlane.f32.xlu0 %v1899
        %v1901 = vpop.xlane.xlu0 %1900
        %v1902 = vsub.f32 %v1815, %v1898
        %v1903 = vsub.f32 %v1893, %v1901
        %v1904 = vmul.f32 %v1902, 1.442695
        %v1905 = vpow.pop %v1904
        %v1906 = vmul.f32 %v1903, 1.442695
        %v1907 = vpow.pop %v1906
        %v1908 = vsel %vm748, %v1905, 0.0
        %1909 = vadd.xlane.f32.xlu0 %v1908
        %v1910 = vpop.xlane.xlu0 %1909
        %v1911 = vsel %vm748, %v1907, 0.0
        %1912 = vadd.xlane.f32.xlu0 %v1911
        %v1913 = vpop.xlane.xlu0 %1912
        %v1914 = vrcp.pop %v1910
        %v1915 = vmul.f32 1.0, %v1914
        %v1916 = vrcp.pop %v1913
        %v1917 = vmul.f32 1.0, %v1916
        %v1918 = vmul.f32 %v1905, %v1915
        %v1919 = vmul.f32 %v1907, %v1917
        %1920 = vrot.lane.b32.xlu0 %v737, 40
        %v1921 = vpop.permute.xlu0 %1920
        %v1924 = vsel %vm748, %v1918, 0
        %1926 = vmatprep.subr.mxu0 0.0
        %1927 = vmatpush1.msra.mxu0 0.0
        %1928 = vmatprep.subr.mxu0 0.0
        %1929 = vmatpush1.msra.mxu0 0.0
        %1930 = vmatprep.subr.mxu0 0.0
        %1931 = vmatpush1.msra.mxu0 0.0
        %1932 = vmatprep.subr.mxu0 0.0
        %1933 = vmatpush1.msra.mxu0 0.0
        %1934 = vmatprep.subr.mxu0 0.0
        %1935 = vmatpush1.msra.mxu0 0.0
        %1936 = vmatprep.subr.mxu0 0.0
        %1937 = vmatpush1.msra.mxu0 0.0
        %1938 = vmatprep.subr.mxu0 0.0
        %1939 = vmatpush1.msra.mxu0 0.0
        %1940 = vmatprep.subr.mxu0 0.0
        %1941 = vmatpush1.msra.mxu0 0.0
        %1942 = vmatprep.subr.mxu0 0.0
        %1943 = vmatpush1.msra.mxu0 0.0
        %1944 = vmatprep.subr.mxu0 0.0
        %1945 = vmatpush1.msra.mxu0 0.0
        %1946 = vmatprep.subr.mxu0 0.0
        %1947 = vmatpush1.msra.mxu0 0.0
        %1948 = vmatprep.subr.mxu0 0.0
        %1949 = vmatpush1.msra.mxu0 0.0
        %1950 = vmatprep.subr.mxu0 0.0
        %1951 = vmatpush1.msra.mxu0 0.0
        %1952 = vmatprep.subr.mxu0 0.0
        %1953 = vmatpush1.msra.mxu0 0.0
        %1954 = vmatprep.subr.mxu0 0.0
        %1955 = vmatpush1.msra.mxu0 0.0
        %1956 = vmatprep.subr.mxu0 0.0
        %1957 = vmatpush1.msra.mxu0 %v1921
        %1958 = vmatprep.subr.mxu0 0.0
        %1959 = vmatpush2.msra.mxu0 0.0
        %1960 = vmatprep.subr.mxu0 0.0
        %1961 = vmatpush2.msra.mxu0 0.0
        %1962 = vmatprep.subr.mxu0 0.0
        %1963 = vmatpush2.msra.mxu0 0.0
        %1964 = vmatprep.subr.mxu0 0.0
        %1965 = vmatpush2.msra.mxu0 0.0
        %1966 = vmatprep.subr.mxu0 0.0
        %1967 = vmatpush2.msra.mxu0 0.0
        %1968 = vmatprep.subr.mxu0 0.0
        %1969 = vmatpush2.msra.mxu0 0.0
        %1970 = vmatprep.subr.mxu0 0.0
        %1971 = vmatpush2.msra.mxu0 0.0
        %1972 = vmatprep.subr.mxu0 0.0
        %1973 = vmatpush2.msra.mxu0 0.0
        %1974 = vmatprep.subr.mxu0 0.0
        %1975 = vmatpush2.msra.mxu0 0.0
        %1976 = vmatprep.subr.mxu0 0.0
        %1977 = vmatpush2.msra.mxu0 0.0
        %1978 = vmatprep.subr.mxu0 0.0
        %1979 = vmatpush2.msra.mxu0 0.0
        %1980 = vmatprep.subr.mxu0 0.0
        %1981 = vmatpush2.msra.mxu0 0.0
        %1982 = vmatprep.subr.mxu0 0.0
        %1983 = vmatpush2.msra.mxu0 0.0
        %1984 = vmatprep.subr.mxu0 0.0
        %1985 = vmatpush2.msra.mxu0 0.0
        %1986 = vmatprep.subr.mxu0 0.0
        %1987 = vmatpush2.msra.mxu0 0.0
        %1988 = vmatprep.subr.mxu0 0.0
        %1989 = vmatpush2.msra.mxu0 0.0
        %1990 = vmatprep.mubr.f32.mxu0 0.0
        %1991 = vmatmul.mubr.f32.gmra.mxu0 %v1924
        %v1992 = vpop.f32.mrf.mxu0
        %v1993 = vadd.f32 0.0, %v1992
        %v1994 = vpop.f32.mrf.mxu0
        %1995 = vdwg.mxu0
        %1996 = vrot.lane.b32.xlu0 %v742, 40
        %v1997 = vpop.permute.xlu0 %1996
        %v2000 = vsel %vm748, %v1919, 0
        %2002 = vmatprep.subr.mxu0 0.0
        %2003 = vmatpush1.msra.mxu0 0.0
        %2004 = vmatprep.subr.mxu0 0.0
        %2005 = vmatpush1.msra.mxu0 0.0
        %2006 = vmatprep.subr.mxu0 0.0
        %2007 = vmatpush1.msra.mxu0 0.0
        %2008 = vmatprep.subr.mxu0 0.0
        %2009 = vmatpush1.msra.mxu0 0.0
        %2010 = vmatprep.subr.mxu0 0.0
        %2011 = vmatpush1.msra.mxu0 0.0
        %2012 = vmatprep.subr.mxu0 0.0
        %2013 = vmatpush1.msra.mxu0 0.0
        %2014 = vmatprep.subr.mxu0 0.0
        %2015 = vmatpush1.msra.mxu0 0.0
        %2016 = vmatprep.subr.mxu0 0.0
        %2017 = vmatpush1.msra.mxu0 0.0
        %2018 = vmatprep.subr.mxu0 0.0
        %2019 = vmatpush1.msra.mxu0 0.0
        %2020 = vmatprep.subr.mxu0 0.0
        %2021 = vmatpush1.msra.mxu0 0.0
        %2022 = vmatprep.subr.mxu0 0.0
        %2023 = vmatpush1.msra.mxu0 0.0
        %2024 = vmatprep.subr.mxu0 0.0
        %2025 = vmatpush1.msra.mxu0 0.0
        %2026 = vmatprep.subr.mxu0 0.0
        %2027 = vmatpush1.msra.mxu0 0.0
        %2028 = vmatprep.subr.mxu0 0.0
        %2029 = vmatpush1.msra.mxu0 0.0
        %2030 = vmatprep.subr.mxu0 0.0
        %2031 = vmatpush1.msra.mxu0 0.0
        %2032 = vmatprep.subr.mxu0 0.0
        %2033 = vmatpush1.msra.mxu0 %v1997
        %2034 = vmatprep.subr.mxu0 0.0
        %2035 = vmatpush2.msra.mxu0 0.0
        %2036 = vmatprep.subr.mxu0 0.0
        %2037 = vmatpush2.msra.mxu0 0.0
        %2038 = vmatprep.subr.mxu0 0.0
        %2039 = vmatpush2.msra.mxu0 0.0
        %2040 = vmatprep.subr.mxu0 0.0
        %2041 = vmatpush2.msra.mxu0 0.0
        %2042 = vmatprep.subr.mxu0 0.0
        %2043 = vmatpush2.msra.mxu0 0.0
        %2044 = vmatprep.subr.mxu0 0.0
        %2045 = vmatpush2.msra.mxu0 0.0
        %2046 = vmatprep.subr.mxu0 0.0
        %2047 = vmatpush2.msra.mxu0 0.0
        %2048 = vmatprep.subr.mxu0 0.0
        %2049 = vmatpush2.msra.mxu0 0.0
        %2050 = vmatprep.subr.mxu0 0.0
        %2051 = vmatpush2.msra.mxu0 0.0
        %2052 = vmatprep.subr.mxu0 0.0
        %2053 = vmatpush2.msra.mxu0 0.0
        %2054 = vmatprep.subr.mxu0 0.0
        %2055 = vmatpush2.msra.mxu0 0.0
        %2056 = vmatprep.subr.mxu0 0.0
        %2057 = vmatpush2.msra.mxu0 0.0
        %2058 = vmatprep.subr.mxu0 0.0
        %2059 = vmatpush2.msra.mxu0 0.0
        %2060 = vmatprep.subr.mxu0 0.0
        %2061 = vmatpush2.msra.mxu0 0.0
        %2062 = vmatprep.subr.mxu0 0.0
        %2063 = vmatpush2.msra.mxu0 0.0
        %2064 = vmatprep.subr.mxu0 0.0
        %2065 = vmatpush2.msra.mxu0 0.0
        %2066 = vmatprep.mubr.f32.mxu0 0.0
        %2067 = vmatmul.mubr.f32.gmra.mxu0 %v2000
        %v2068 = vpop.f32.mrf.mxu0
        %v2069 = vadd.f32 0.0, %v2068
        %v2070 = vpop.f32.mrf.mxu0
        %2071 = vdwg.mxu0
        %2074 = vrot.lane.b32.xlu0 %v1329, 8
        %v2075 = vpop.permute.xlu0 %2074
        %2076 = vrot.lane.b32.xlu0 %v1405, 8
        %v2077 = vpop.permute.xlu0 %2076
        %2082 = vrot.lane.b32.xlu0 %v1661, 16
        %v2083 = vpop.permute.xlu0 %2082
        %2084 = vrot.lane.b32.xlu0 %v1737, 16
        %v2085 = vpop.permute.xlu0 %2084
        %2090 = vrot.lane.b32.xlu0 %v1993, 24
        %v2091 = vpop.permute.xlu0 %2090
        %2092 = vrot.lane.b32.xlu0 %v2069, 24
        %v2093 = vpop.permute.xlu0 %2092
        %v2096 = vsel %vm748, %v997, %v2075
        %v2097 = vsel %vm748, %v1073, %v2077
        %vm2098 = vcmask 130048
        %v2099 = vsel %vm2098, %v2096, %v2083
        %v2100 = vsel %vm2098, %v2097, %v2085
        %vm2101 = vcmask 195584
        %v2102 = vsel %vm2101, %v2099, %v2091
        %v2103 = vsel %vm2101, %v2100, %v2093
        %v2104 = vld [vmem:[%s608] sm:$0xff]
        %v2105 = vld [vmem:[%s608 + $0x8] sm:$0xff]
        %v2106 = vld [vmem:[%s608 + $0x10] sm:$0xff]
        %v2107 = vld [vmem:[%s608 + $0x18] sm:$0xff]
        %v2108 = vld [vmem:[%s611] sm:$0x1]
        %v2110 = vlaneseq
        %v2111 = vshrl.u32 %v2110, 7
        %v2112 = vsub.s32 0, %v2111
        %v2113 = vrot.slane %v2108, %v2112
        %v2116 = vsel %vm663, %v2102, 0
        %v2119 = vsel %vm663, %v2103, 0
        %2121 = vmatprep.subr.mxu0 0.0
        %2122 = vmatpush1.msra.mxu0 0.0
        %2123 = vmatprep.subr.mxu0 0.0
        %2124 = vmatpush1.msra.mxu0 0.0
        %2125 = vmatprep.subr.mxu0 0.0
        %2126 = vmatpush1.msra.mxu0 0.0
        %2127 = vmatprep.subr.mxu0 0.0
        %2128 = vmatpush1.msra.mxu0 0.0
        %2129 = vmatprep.subr.mxu0 0.0
        %2130 = vmatpush1.msra.mxu0 0.0
        %2131 = vmatprep.subr.mxu0 0.0
        %2132 = vmatpush1.msra.mxu0 0.0
        %2133 = vmatprep.subr.mxu0 0.0
        %2134 = vmatpush1.msra.mxu0 0.0
        %2135 = vmatprep.subr.mxu0 0.0
        %2136 = vmatpush1.msra.mxu0 0.0
        %2137 = vmatprep.subr.mxu0 0.0
        %2138 = vmatpush1.msra.mxu0 0.0
        %2139 = vmatprep.subr.mxu0 0.0
        %2140 = vmatpush1.msra.mxu0 0.0
        %2141 = vmatprep.subr.mxu0 0.0
        %2142 = vmatpush1.msra.mxu0 0.0
        %2143 = vmatprep.subr.mxu0 0.0
        %2144 = vmatpush1.msra.mxu0 0.0
        %2145 = vmatprep.subr.mxu0 0.0
        %2146 = vmatpush1.msra.mxu0 %v2107
        %2147 = vmatprep.subr.mxu0 0.0
        %2148 = vmatpush1.msra.mxu0 %v2106
        %2149 = vmatprep.subr.mxu0 0.0
        %2150 = vmatpush1.msra.mxu0 %v2105
        %2151 = vmatprep.subr.mxu0 0.0
        %2152 = vmatpush1.msra.mxu0 %v2104
        %2153 = vmatprep.subr.mxu0 0.0
        %2154 = vmatpush2.msra.mxu0 0.0
        %2155 = vmatprep.subr.mxu0 0.0
        %2156 = vmatpush2.msra.mxu0 0.0
        %2157 = vmatprep.subr.mxu0 0.0
        %2158 = vmatpush2.msra.mxu0 0.0
        %2159 = vmatprep.subr.mxu0 0.0
        %2160 = vmatpush2.msra.mxu0 0.0
        %2161 = vmatprep.subr.mxu0 0.0
        %2162 = vmatpush2.msra.mxu0 0.0
        %2163 = vmatprep.subr.mxu0 0.0
        %2164 = vmatpush2.msra.mxu0 0.0
        %2165 = vmatprep.subr.mxu0 0.0
        %2166 = vmatpush2.msra.mxu0 0.0
        %2167 = vmatprep.subr.mxu0 0.0
        %2168 = vmatpush2.msra.mxu0 0.0
        %2169 = vmatprep.subr.mxu0 0.0
        %2170 = vmatpush2.msra.mxu0 0.0
        %2171 = vmatprep.subr.mxu0 0.0
        %2172 = vmatpush2.msra.mxu0 0.0
        %2173 = vmatprep.subr.mxu0 0.0
        %2174 = vmatpush2.msra.mxu0 0.0
        %2175 = vmatprep.subr.mxu0 0.0
        %2176 = vmatpush2.msra.mxu0 0.0
        %2177 = vmatprep.subr.mxu0 0.0
        %2178 = vmatpush2.msra.mxu0 0.0
        %2179 = vmatprep.subr.mxu0 0.0
        %2180 = vmatpush2.msra.mxu0 0.0
        %2181 = vmatprep.subr.mxu0 0.0
        %2182 = vmatpush2.msra.mxu0 0.0
        %2183 = vmatprep.subr.mxu0 0.0
        %2184 = vmatpush2.msra.mxu0 0.0
        %2185 = vmatprep.mubr.f32.mxu0 0.0
        %2186 = vmatmul.mubr.f32.gmra.mxu0 %v2116
        %v2187 = vpop.f32.mrf.mxu0
        %v2188 = vadd.f32 %v2113, %v2187
        %v2189 = vpop.f32.mrf.mxu0
        %2190 = vmatprep.mubr.f32.mxu0 0.0
        %2191 = vmatmul.mubr.f32.gmra.mxu0 %v2119
        %v2192 = vpop.f32.mrf.mxu0
        %v2193 = vadd.f32 %v2113, %v2192
        %v2194 = vpop.f32.mrf.mxu0
        %2195 = vdwg.mxu0
        %v2196 = vadd.f32 %v2188, %v650
        %v2197 = vadd.f32 %v2193, %v651
        %v2198 = vld [vmem:[%s614] sm:$0x1]
        %v2199 = vld [vmem:[%s617] sm:$0x1]
        %v2200 = vsel %vm663, %v2196, 0.0
        %2201 = vadd.xlane.f32.xlu0 %v2200
        %v2202 = vpop.xlane.xlu0 %2201
        %v2203 = vsel %vm663, %v2197, 0.0
        %2204 = vadd.xlane.f32.xlu0 %v2203
        %v2205 = vpop.xlane.xlu0 %2204
        %v2206 = vrcp.pop 32.0
        %v2207 = vmul.f32 %v2202, %v2206
        %v2208 = vmul.f32 %v2205, %v2206
        %v2209 = vmul.f32 %v2196, %v2196
        %v2210 = vmul.f32 %v2197, %v2197
        %v2211 = vsel %vm663, %v2209, 0.0
        %2212 = vadd.xlane.f32.xlu0 %v2211
        %v2213 = vpop.xlane.xlu0 %2212
        %v2214 = vsel %vm663, %v2210, 0.0
        %2215 = vadd.xlane.f32.xlu0 %v2214
        %v2216 = vpop.xlane.xlu0 %2215
        %v2217 = vmul.f32 %v2213, %v2206
        %v2218 = vmul.f32 %v2216, %v2206
        %v2219 = vmul.f32 %v2207, %v2207
        %v2220 = vmul.f32 %v2208, %v2208
        %v2221 = vsub.f32 %v2217, %v2219
        %v2222 = vsub.f32 %v2218, %v2220
        %v2223 = vmax.f32 %v2221, 0.0
        %v2224 = vmax.f32 %v2222, 0.0
        %v2225 = vsub.f32 %v2196, %v2207
        %v2226 = vsub.f32 %v2197, %v2208
        %v2227 = vadd.f32 %v2223, 1e-05
        %v2228 = vadd.f32 %v2224, 1e-05
        %v2229 = vrsqrt.pop %v2227
        %v2230 = vrsqrt.pop %v2228
        %v2231 = vmul.f32 %v2225, %v2229
        %v2232 = vmul.f32 %v2226, %v2230
        %v2234 = vlaneseq
        %v2235 = vshrl.u32 %v2234, 7
        %v2236 = vsub.s32 0, %v2235
        %v2237 = vrot.slane %v2198, %v2236
        %v2239 = vmul.f32 %v2231, %v2237
        %v2240 = vmul.f32 %v2232, %v2237
        %v2242 = vlaneseq
        %v2243 = vshrl.u32 %v2242, 7
        %v2244 = vsub.s32 0, %v2243
        %v2245 = vrot.slane %v2199, %v2244
        %v2247 = vadd.f32 %v2239, %v2245
        %v2248 = vadd.f32 %v2240, %v2245
        %v2249 = vld [vmem:[%s622] sm:$0xff]
        %v2250 = vld [vmem:[%s622 + $0x8] sm:$0xff]
        %v2251 = vld [vmem:[%s622 + $0x10] sm:$0xff]
        %v2252 = vld [vmem:[%s622 + $0x18] sm:$0xff]
        %v2253 = vld [vmem:[%s625] sm:$0x1]
        %v2255 = vlaneseq
        %v2256 = vshrl.u32 %v2255, 7
        %v2257 = vsub.s32 0, %v2256
        %v2258 = vrot.slane %v2253, %v2257
        %v2261 = vsel %vm663, %v2247, 0
        %v2264 = vsel %vm663, %v2248, 0
        %2266 = vmatprep.subr.mxu0 0.0
        %2267 = vmatpush1.msra.mxu0 0.0
        %2268 = vmatprep.subr.mxu0 0.0
        %2269 = vmatpush1.msra.mxu0 0.0
        %2270 = vmatprep.subr.mxu0 0.0
        %2271 = vmatpush1.msra.mxu0 0.0
        %2272 = vmatprep.subr.mxu0 0.0
        %2273 = vmatpush1.msra.mxu0 0.0
        %2274 = vmatprep.subr.mxu0 0.0
        %2275 = vmatpush1.msra.mxu0 0.0
        %2276 = vmatprep.subr.mxu0 0.0
        %2277 = vmatpush1.msra.mxu0 0.0
        %2278 = vmatprep.subr.mxu0 0.0
        %2279 = vmatpush1.msra.mxu0 0.0
        %2280 = vmatprep.subr.mxu0 0.0
        %2281 = vmatpush1.msra.mxu0 0.0
        %2282 = vmatprep.subr.mxu0 0.0
        %2283 = vmatpush1.msra.mxu0 0.0
        %2284 = vmatprep.subr.mxu0 0.0
        %2285 = vmatpush1.msra.mxu0 0.0
        %2286 = vmatprep.subr.mxu0 0.0
        %2287 = vmatpush1.msra.mxu0 0.0
        %2288 = vmatprep.subr.mxu0 0.0
        %2289 = vmatpush1.msra.mxu0 0.0
        %2290 = vmatprep.subr.mxu0 0.0
        %2291 = vmatpush1.msra.mxu0 %v2252
        %2292 = vmatprep.subr.mxu0 0.0
        %2293 = vmatpush1.msra.mxu0 %v2251
        %2294 = vmatprep.subr.mxu0 0.0
        %2295 = vmatpush1.msra.mxu0 %v2250
        %2296 = vmatprep.subr.mxu0 0.0
        %2297 = vmatpush1.msra.mxu0 %v2249
        %2298 = vmatprep.subr.mxu0 0.0
        %2299 = vmatpush2.msra.mxu0 0.0
        %2300 = vmatprep.subr.mxu0 0.0
        %2301 = vmatpush2.msra.mxu0 0.0
        %2302 = vmatprep.subr.mxu0 0.0
        %2303 = vmatpush2.msra.mxu0 0.0
        %2304 = vmatprep.subr.mxu0 0.0
        %2305 = vmatpush2.msra.mxu0 0.0
        %2306 = vmatprep.subr.mxu0 0.0
        %2307 = vmatpush2.msra.mxu0 0.0
        %2308 = vmatprep.subr.mxu0 0.0
        %2309 = vmatpush2.msra.mxu0 0.0
        %2310 = vmatprep.subr.mxu0 0.0
        %2311 = vmatpush2.msra.mxu0 0.0
        %2312 = vmatprep.subr.mxu0 0.0
        %2313 = vmatpush2.msra.mxu0 0.0
        %2314 = vmatprep.subr.mxu0 0.0
        %2315 = vmatpush2.msra.mxu0 0.0
        %2316 = vmatprep.subr.mxu0 0.0
        %2317 = vmatpush2.msra.mxu0 0.0
        %2318 = vmatprep.subr.mxu0 0.0
        %2319 = vmatpush2.msra.mxu0 0.0
        %2320 = vmatprep.subr.mxu0 0.0
        %2321 = vmatpush2.msra.mxu0 0.0
        %2322 = vmatprep.subr.mxu0 0.0
        %2323 = vmatpush2.msra.mxu0 0.0
        %2324 = vmatprep.subr.mxu0 0.0
        %2325 = vmatpush2.msra.mxu0 0.0
        %2326 = vmatprep.subr.mxu0 0.0
        %2327 = vmatpush2.msra.mxu0 0.0
        %2328 = vmatprep.subr.mxu0 0.0
        %2329 = vmatpush2.msra.mxu0 0.0
        %2330 = vmatprep.mubr.f32.mxu0 0.0
        %2331 = vmatmul.mubr.f32.gmra.mxu0 %v2261
        %v2332 = vpop.f32.mrf.mxu0
        %v2333 = vadd.f32 %v2258, %v2332
        %v2334 = vpop.f32.mrf.mxu0
        %2335 = vmatprep.mubr.f32.mxu0 0.0
        %2336 = vmatmul.mubr.f32.gmra.mxu0 %v2264
        %v2337 = vpop.f32.mrf.mxu0
        %v2338 = vadd.f32 %v2258, %v2337
        %v2339 = vpop.f32.mrf.mxu0
        %2340 = vdwg.mxu0
        %v2341 = vmax.f32 %v2333, 0.0
        %v2342 = vmax.f32 %v2338, 0.0
        %v2343 = vld [vmem:[%s630] sm:$0xff]
        %v2344 = vld [vmem:[%s630 + $0x8] sm:$0xff]
        %v2345 = vld [vmem:[%s630 + $0x10] sm:$0xff]
        %v2346 = vld [vmem:[%s630 + $0x18] sm:$0xff]
        %v2347 = vld [vmem:[%s630 + $0x20] sm:$0xff]
        %v2348 = vld [vmem:[%s630 + $0x28] sm:$0xff]
        %v2349 = vld [vmem:[%s630 + $0x30] sm:$0xff]
        %v2350 = vld [vmem:[%s630 + $0x38] sm:$0xff]
        %v2351 = vld [vmem:[%s633] sm:$0x1]
        %v2353 = vlaneseq
        %v2354 = vshrl.u32 %v2353, 7
        %v2355 = vsub.s32 0, %v2354
        %v2356 = vrot.slane %v2351, %v2355
        %vm2358 = vcmask 523264
        %v2360 = vsel %vm2358, %v2341, 0
        %v2363 = vsel %vm2358, %v2342, 0
        %2365 = vmatprep.subr.mxu0 0.0
        %2366 = vmatpush1.msra.mxu0 0.0
        %2367 = vmatprep.subr.mxu0 0.0
        %2368 = vmatpush1.msra.mxu0 0.0
        %2369 = vmatprep.subr.mxu0 0.0
        %2370 = vmatpush1.msra.mxu0 0.0
        %2371 = vmatprep.subr.mxu0 0.0
        %2372 = vmatpush1.msra.mxu0 0.0
        %2373 = vmatprep.subr.mxu0 0.0
        %2374 = vmatpush1.msra.mxu0 0.0
        %2375 = vmatprep.subr.mxu0 0.0
        %2376 = vmatpush1.msra.mxu0 0.0
        %2377 = vmatprep.subr.mxu0 0.0
        %2378 = vmatpush1.msra.mxu0 0.0
        %2379 = vmatprep.subr.mxu0 0.0
        %2380 = vmatpush1.msra.mxu0 0.0
        %2381 = vmatprep.subr.mxu0 0.0
        %2382 = vmatpush1.msra.mxu0 %v2350
        %2383 = vmatprep.subr.mxu0 0.0
        %2384 = vmatpush1.msra.mxu0 %v2349
        %2385 = vmatprep.subr.mxu0 0.0
        %2386 = vmatpush1.msra.mxu0 %v2348
        %2387 = vmatprep.subr.mxu0 0.0
        %2388 = vmatpush1.msra.mxu0 %v2347
        %2389 = vmatprep.subr.mxu0 0.0
        %2390 = vmatpush1.msra.mxu0 %v2346
        %2391 = vmatprep.subr.mxu0 0.0
        %2392 = vmatpush1.msra.mxu0 %v2345
        %2393 = vmatprep.subr.mxu0 0.0
        %2394 = vmatpush1.msra.mxu0 %v2344
        %2395 = vmatprep.subr.mxu0 0.0
        %2396 = vmatpush1.msra.mxu0 %v2343
        %2397 = vmatprep.subr.mxu0 0.0
        %2398 = vmatpush2.msra.mxu0 0.0
        %2399 = vmatprep.subr.mxu0 0.0
        %2400 = vmatpush2.msra.mxu0 0.0
        %2401 = vmatprep.subr.mxu0 0.0
        %2402 = vmatpush2.msra.mxu0 0.0
        %2403 = vmatprep.subr.mxu0 0.0
        %2404 = vmatpush2.msra.mxu0 0.0
        %2405 = vmatprep.subr.mxu0 0.0
        %2406 = vmatpush2.msra.mxu0 0.0
        %2407 = vmatprep.subr.mxu0 0.0
        %2408 = vmatpush2.msra.mxu0 0.0
        %2409 = vmatprep.subr.mxu0 0.0
        %2410 = vmatpush2.msra.mxu0 0.0
        %2411 = vmatprep.subr.mxu0 0.0
        %2412 = vmatpush2.msra.mxu0 0.0
        %2413 = vmatprep.subr.mxu0 0.0
        %2414 = vmatpush2.msra.mxu0 0.0
        %2415 = vmatprep.subr.mxu0 0.0
        %2416 = vmatpush2.msra.mxu0 0.0
        %2417 = vmatprep.subr.mxu0 0.0
        %2418 = vmatpush2.msra.mxu0 0.0
        %2419 = vmatprep.subr.mxu0 0.0
        %2420 = vmatpush2.msra.mxu0 0.0
        %2421 = vmatprep.subr.mxu0 0.0
        %2422 = vmatpush2.msra.mxu0 0.0
        %2423 = vmatprep.subr.mxu0 0.0
        %2424 = vmatpush2.msra.mxu0 0.0
        %2425 = vmatprep.subr.mxu0 0.0
        %2426 = vmatpush2.msra.mxu0 0.0
        %2427 = vmatprep.subr.mxu0 0.0
        %2428 = vmatpush2.msra.mxu0 0.0
        %2429 = vmatprep.mubr.f32.mxu0 0.0
        %2430 = vmatmul.mubr.f32.gmra.mxu0 %v2360
        %v2431 = vpop.f32.mrf.mxu0
        %v2432 = vadd.f32 %v2356, %v2431
        %v2433 = vpop.f32.mrf.mxu0
        %2434 = vmatprep.mubr.f32.mxu0 0.0
        %2435 = vmatmul.mubr.f32.gmra.mxu0 %v2363
        %v2436 = vpop.f32.mrf.mxu0
        %v2437 = vadd.f32 %v2356, %v2436
        %v2438 = vpop.f32.mrf.mxu0
        %2439 = vdwg.mxu0
        %v2440 = vadd.f32 %v2432, %v2247
        %v2441 = vadd.f32 %v2437, %v2248
        %v2442 = vld [vmem:[%s636] sm:$0x1]
        %v2443 = vld [vmem:[%s639] sm:$0x1]
        %v2444 = vsel %vm663, %v2440, 0.0
        %2445 = vadd.xlane.f32.xlu0 %v2444
        %v2446 = vpop.xlane.xlu0 %2445
        %v2447 = vsel %vm663, %v2441, 0.0
        %2448 = vadd.xlane.f32.xlu0 %v2447
        %v2449 = vpop.xlane.xlu0 %2448
        %v2450 = vmul.f32 %v2446, %v2206
        %v2451 = vmul.f32 %v2449, %v2206
        %v2452 = vmul.f32 %v2440, %v2440
        %v2453 = vmul.f32 %v2441, %v2441
        %v2454 = vsel %vm663, %v2452, 0.0
        %2455 = vadd.xlane.f32.xlu0 %v2454
        %v2456 = vpop.xlane.xlu0 %2455
        %v2457 = vsel %vm663, %v2453, 0.0
        %2458 = vadd.xlane.f32.xlu0 %v2457
        %v2459 = vpop.xlane.xlu0 %2458
        %v2460 = vmul.f32 %v2456, %v2206
        %v2461 = vmul.f32 %v2459, %v2206
        %v2462 = vmul.f32 %v2450, %v2450
        %v2463 = vmul.f32 %v2451, %v2451
        %v2464 = vsub.f32 %v2460, %v2462
        %v2465 = vsub.f32 %v2461, %v2463
        %v2466 = vmax.f32 %v2464, 0.0
        %v2467 = vmax.f32 %v2465, 0.0
        %v2468 = vsub.f32 %v2440, %v2450
        %v2469 = vsub.f32 %v2441, %v2451
        %v2470 = vadd.f32 %v2466, 1e-05
        %v2471 = vadd.f32 %v2467, 1e-05
        %v2472 = vrsqrt.pop %v2470
        %v2473 = vrsqrt.pop %v2471
        %v2474 = vmul.f32 %v2468, %v2472
        %v2475 = vmul.f32 %v2469, %v2473
        %v2477 = vlaneseq
        %v2478 = vshrl.u32 %v2477, 7
        %v2479 = vsub.s32 0, %v2478
        %v2480 = vrot.slane %v2442, %v2479
        %v2482 = vmul.f32 %v2474, %v2480
        %v2483 = vmul.f32 %v2475, %v2480
        %v2485 = vlaneseq
        %v2486 = vshrl.u32 %v2485, 7
        %v2487 = vsub.s32 0, %v2486
        %v2488 = vrot.slane %v2443, %v2487
        %v2490 = vadd.f32 %v2482, %v2488
        %v2491 = vadd.f32 %v2483, %v2488
        %2492 = vst.msk [vmem:[#allocation5] sm:$0xff] %vm663, %v2490
        %2493 = vst.msk [vmem:[#allocation5 + $0x8] sm:$0xff] %vm663, %v2491
        // Predicated region
        $region81: #{tpu_custom_call.1} parent=71 // pred_check
          %p2494 = pneg %p394
        $region82: #{tpu_custom_call.1} parent=71 // pred_check_branch
          %2496 = sbr.rel (%p2494) target = $region84
        $region83: #{tpu_custom_call.1} parent=71 // pred_region
          %s2497 = smul.u32 2, %s30
          %s2499 = ssub.s32 256, 256
          %2500 = vsyncadd [#allocation4], %s2499
          %s2501 = smul.addr %s2497, 128
          %s2502 = scalar_lea.hbm %s13, %s2501
          %s2503 = sshll.u32 [#allocation5], 4
          %s2504 = int_to_ptr.vmem [resolvable:$true] %s2503
          %2509 = dma.vmem_to_hbm [thread:$0]  %s2504, 256, %s2502, [#allocation4], 128, 128, 8
        $region84: #{tpu_custom_call.1} parent=71 // pred_fallthru
          _
        // Predicated region
        $region85: #{tpu_custom_call.1} parent=71 // pred_check
          %p2510 = pneg %p394
        $region86: #{tpu_custom_call.1} parent=71 // pred_check_branch
          %2512 = sbr.rel (%p2510) target = $region88
        $region87: #{tpu_custom_call.1} parent=71 // pred_region
          %2513 = dma.done [#allocation4], 256
        $region88: #{tpu_custom_call.1} parent=71 // pred_fallthru
          _
      $region72: #{tpu_custom_call.1} parent=5 // pred_fallthru
        _
      %p2514 = scmp.le.s32.totalorder 2, %s21
      // Predicated region
      $region89: #{tpu_custom_call.1} parent=5 // pred_check
        %p2515 = pneg %p2514
      $region90: #{tpu_custom_call.1} parent=5 // pred_check_branch
        %2517 = sbr.rel (%p2515) target = $region92
      $region91: #{tpu_custom_call.1} parent=5 // pred_region
        %s2518 = ssub.s32 %s21, 2
      $region92: #{tpu_custom_call.1} parent=5 // pred_fallthru
        _
    $region6: #{tpu_custom_call.1} parent=1 // loop_footer
      %s25 = sadd.s32 1, %s21
    $region7: #{tpu_custom_call.1} parent=1 // loop_footer_branch
      %20 = sbr.rel target = $region3
    $region8: #{tpu_custom_call.1} parent=1 // loop_exit
      _
    %2519 = vsyncpa [#allocation3], 1
    %s2520 = scalar_lea.sflag [#allocation3], 1
    %2521 = vsyncpa %s2520, 1
    %2522 = vsyncpa [#allocation4], 1
    %s2523 = scalar_lea.sflag [#allocation4], 1
    %2524 = vsyncpa %s2523, 1

</llo_original>
